<compile_context>
chip_gen: v5e
topology: v5e:2x2
jax: 0.10.0
libtpu: 0.0.40
codegen_flags: <defaults>
</compile_context>

<pallas_src>
import math
import functools

import jax
import jax.numpy as jnp
from jax import lax
from jax.experimental import pallas as pl
from jax.experimental.pallas import tpu as pltpu


def _flash_sdpa_dropout_kernel(mask_ref, q_ref, k_ref, v_ref, o_ref,
                               m_sc, l_sc, acc_sc,
                               *, scale, p_drop, seed, seq_len):
    # mask_ref: (1, tq, tk) bf16   q_ref: (1, tq, D)   k_ref/v_ref: (1, tk, D)
    bh = pl.program_id(0)
    qi = pl.program_id(1)
    ki = pl.program_id(2)

    tq = q_ref.shape[1]
    tk = k_ref.shape[1]

    @pl.when(ki == 0)
    def _init():
        m_sc[...] = jnp.full(m_sc.shape, -1e30, dtype=m_sc.dtype)
        l_sc[...] = jnp.zeros(l_sc.shape, dtype=l_sc.dtype)
        acc_sc[...] = jnp.zeros(acc_sc.shape, dtype=acc_sc.dtype)

    # Fold 1/sqrt(D) into q (tq*D elems instead of tq*tk), cast operands to
    # bf16 for native MXU rate; contraction dims instead of an explicit .T.
    q = (q_ref[0] * scale).astype(jnp.bfloat16)                 # (tq, D)
    k = k_ref[0].astype(jnp.bfloat16)                           # (tk, D)
    s = lax.dot_general(q, k, (((1,), (1,)), ((), ())),
                        preferred_element_type=jnp.float32)     # (tq, tk)
    s = s + mask_ref[0].astype(jnp.float32)

    # Online softmax update.
    m_prev = m_sc[...]                                          # (tq, 1)
    m_new = jnp.maximum(m_prev, jnp.max(s, axis=-1, keepdims=True))
    alpha = jnp.exp(m_prev - m_new)                             # (tq, 1)
    probs = jnp.exp(s - m_new)                                  # (tq, tk)
    l_sc[...] = alpha * l_sc[...] + jnp.sum(probs, axis=-1, keepdims=True)
    m_sc[...] = m_new

    # Dropout on the (unnormalized) probabilities: equivalent to dropping the
    # normalized attention weights since the denominator uses the full sum.
    if p_drop > 0.0:
        rows = lax.broadcasted_iota(jnp.int32, (tq, tk), 0) + qi * tq
        cols = lax.broadcasted_iota(jnp.int32, (tq, tk), 1) + ki * tk
        x = rows * seq_len + cols + (bh + 1) * 0x61C88647 + seed   # int32, wraps
        x = x.astype(jnp.uint32)
        # murmur3-style finalizer
        x = x ^ (x >> 16)
        x = x * jnp.uint32(0x7FEB352D)
        x = x ^ (x >> 15)
        x = x * jnp.uint32(0x846CA68B)
        x = x ^ (x >> 16)
        thresh = jnp.uint32(min(int(round(p_drop * 4294967296.0)), 4294967295))
        probs = jnp.where(x >= thresh, probs, 0.0)

    acc_sc[...] = alpha * acc_sc[...] + jnp.dot(
        probs.astype(jnp.bfloat16), v_ref[0].astype(jnp.bfloat16),
        preferred_element_type=jnp.float32)

    @pl.when(ki == pl.num_programs(2) - 1)
    def _finalize():
        # softmax denominator (approx reciprocal -> EUP) with the 1/(1-p)
        # dropout scale folded into the same multiply.
        inv = pl.reciprocal(l_sc[...], approx=True) * (1.0 / (1.0 - p_drop))
        o_ref[0] = (acc_sc[...] * inv).astype(o_ref.dtype)


def sdpa_with_dropout(query, key, value, attn_mask, *, seed=0, p_drop=0.1,
                      tq=128, tk=128):
    """query/key/value: [B, H, S, D] float32; attn_mask: [..., S, S]."""
    B, H, S, D = query.shape
    assert key.shape == (B, H, S, D) and value.shape == (B, H, S, D)
    assert attn_mask.shape[-2:] == (S, S)
    assert S % tq == 0 and S % tk == 0

    BH = B * H
    q = query.reshape(BH, S, D)
    k = key.reshape(BH, S, D)
    v = value.reshape(BH, S, D)
    # bf16 mask: halves the re-streamed O(S^2) mask HBM traffic & VMEM buffers.
    mask = attn_mask.reshape(1, S, S).astype(jnp.bfloat16)

    kernel = functools.partial(
        _flash_sdpa_dropout_kernel,
        scale=1.0 / math.sqrt(D), p_drop=float(p_drop),
        seed=int(seed), seq_len=int(S))

    out = pl.pallas_call(
        kernel,
        out_shape=jax.ShapeDtypeStruct((BH, S, D), query.dtype),
        grid_spec=pltpu.PrefetchScalarGridSpec(
            num_scalar_prefetch=0,
            grid=(BH, S // tq, S // tk),
            in_specs=[
                # additive mask tile, broadcast over BH
                pl.BlockSpec((1, tq, tk), lambda bh, qi, ki: (0, qi, ki)),
                # query tile (constant across the key axis)
                pl.BlockSpec((1, tq, D), lambda bh, qi, ki: (bh, qi, 0)),
                # key / value tiles streamed along the reduction axis
                pl.BlockSpec((1, tk, D), lambda bh, qi, ki: (bh, ki, 0)),
                pl.BlockSpec((1, tk, D), lambda bh, qi, ki: (bh, ki, 0)),
            ],
            out_specs=pl.BlockSpec((1, tq, D), lambda bh, qi, ki: (bh, qi, 0)),
            scratch_shapes=[
                pltpu.VMEM((tq, 1), jnp.float32),   # running row max
                pltpu.VMEM((tq, 1), jnp.float32),   # running denominator
                pltpu.VMEM((tq, D), jnp.float32),   # output accumulator
            ],
        ),
        compiler_params=pltpu.CompilerParams(
            dimension_semantics=("parallel", "parallel", "arbitrary"),
            vmem_limit_bytes=32 * 1024 * 1024,
        ),
    )(mask, q, k, v)

    return out.reshape(B, H, S, D)


def _reference_sdpa(query, key, value, attn_mask):
    d = query.shape[-1]
    s = jnp.einsum("bhqd,bhkd->bhqk", query, key) / math.sqrt(d)
    s = s + attn_mask
    p = jax.nn.softmax(s, axis=-1)
    return jnp.einsum("bhqk,bhkd->bhqd", p, value)


if __name__ == "__main__":
    # Small shapes consistent with the module's [B, H, S, D] attention inputs.
    B, H, S, D = 1, 2, 256, 128
    root = jax.random.PRNGKey(0)
    kq, kk, kv, km = jax.random.split(root, 4)

    query = jax.random.normal(kq, (B, H, S, D), dtype=jnp.float32)
    key_t = jax.random.normal(kk, (B, H, S, D), dtype=jnp.float32)
    value = jax.random.normal(kv, (B, H, S, D), dtype=jnp.float32)
    attn_mask = jax.random.normal(km, (1, 1, S, S), dtype=jnp.float32)

    # Correctness check with dropout disabled (deterministic path).
    out_nodrop = sdpa_with_dropout(query, key_t, value, attn_mask,
                                   seed=0, p_drop=0.0)
    out_nodrop = jax.block_until_ready(out_nodrop)
    ref = _reference_sdpa(query, key_t, value, attn_mask)
    max_err = float(jnp.max(jnp.abs(out_nodrop - ref)))
    assert max_err < 1e-1, f"no-dropout path mismatch, max abs err {max_err}"

    # Actual forward pass semantics of the module: dropout p=0.1, training.
    out = sdpa_with_dropout(query, key_t, value, attn_mask, seed=0, p_drop=0.1)
    out = jax.block_until_ready(out)

    assert out.shape == (B, H, S, D), out.shape
    assert bool(jnp.all(jnp.isfinite(out)))
    print("KERNEL_OK")
</pallas_src>

<mosaic_0001>
module attributes {stable_mosaic.version = 11 : i64} {
  func.func @_flash_sdpa_dropout_kernel(%arg0: i32, %arg1: i32, %arg2: i32, %arg3: memref<1x128x128xbf16, #tpu.memory_space<vmem>>, %arg4: memref<1x128x128xf32, #tpu.memory_space<vmem>>, %arg5: memref<1x128x128xf32, #tpu.memory_space<vmem>>, %arg6: memref<1x128x128xf32, #tpu.memory_space<vmem>>, %arg7: memref<1x128x128xf32, #tpu.memory_space<vmem>>, %arg8: memref<128x1xf32, #tpu.memory_space<vmem>>, %arg9: memref<128x1xf32, #tpu.memory_space<vmem>>, %arg10: memref<128x128xf32, #tpu.memory_space<vmem>>) attributes {dimension_semantics = [#tpu.dimension_semantics<parallel>, #tpu.dimension_semantics<parallel>, #tpu.dimension_semantics<arbitrary>], iteration_bounds = array<i64: 2, 2, 2>, scalar_prefetch = 0 : i64, scratch_operands = 3 : i64, tpu.core_type = #tpu.core_type<tc>, window_params = [{transform_indices = @transform_0, window_bounds = array<i64: 1, 128, 128>}, {transform_indices = @transform_1, window_bounds = array<i64: 1, 128, 128>}, {transform_indices = @transform_2, window_bounds = array<i64: 1, 128, 128>}, {transform_indices = @transform_3, window_bounds = array<i64: 1, 128, 128>}, {transform_indices = @transform_4, window_bounds = array<i64: 1, 128, 128>}]} {
    %c0_i32 = arith.constant 0 : i32
    %0 = arith.cmpi eq, %arg2, %c0_i32 : i32
    %1 = arith.extui %0 : i1 to i32
    %c0_i32_0 = arith.constant 0 : i32
    %2 = arith.cmpi ne, %1, %c0_i32_0 : i32
    scf.if %2 {
      %cst_29 = arith.constant -1.000000e+30 : f32
      %45 = vector.broadcast %cst_29 : f32 to vector<128x1xf32>
      %c0_30 = arith.constant 0 : index
      %c0_31 = arith.constant 0 : index
      %46 = vector.load %arg8[%c0_30, %c0_31] : memref<128x1xf32, #tpu.memory_space<vmem>>, vector<128x1xf32>
      tpu.vector_store %arg8[%c0_30, %c0_31], %45 {strides = array<i32>} : memref<128x1xf32, #tpu.memory_space<vmem>>, vector<128x1xf32>,
      %cst_32 = arith.constant 0.000000e+00 : f32
      %47 = vector.broadcast %cst_32 : f32 to vector<128x1xf32>
      %c0_33 = arith.constant 0 : index
      %c0_34 = arith.constant 0 : index
      %48 = vector.load %arg9[%c0_33, %c0_34] : memref<128x1xf32, #tpu.memory_space<vmem>>, vector<128x1xf32>
      tpu.vector_store %arg9[%c0_33, %c0_34], %47 {strides = array<i32>} : memref<128x1xf32, #tpu.memory_space<vmem>>, vector<128x1xf32>,
      %cst_35 = arith.constant 0.000000e+00 : f32
      %49 = vector.broadcast %cst_35 : f32 to vector<128x128xf32>
      %c0_36 = arith.constant 0 : index
      %c0_37 = arith.constant 0 : index
      %50 = vector.load %arg10[%c0_36, %c0_37] : memref<128x128xf32, #tpu.memory_space<vmem>>, vector<128x128xf32>
      tpu.vector_store %arg10[%c0_36, %c0_37], %49 {strides = array<i32>} : memref<128x128xf32, #tpu.memory_space<vmem>>, vector<128x128xf32>,
    } else {
    }
    %c0 = arith.constant 0 : index
    %c0_1 = arith.constant 0 : index
    %c0_2 = arith.constant 0 : index
    %3 = vector.load %arg4[%c0, %c0_1, %c0_2] : memref<1x128x128xf32, #tpu.memory_space<vmem>>, vector<1x128x128xf32>
    %4 = vector.shape_cast %3 : vector<1x128x128xf32> to vector<128x128xf32>
    %cst = arith.constant 0.0883883461 : f32
    %5 = vector.broadcast %cst : f32 to vector<128x128xf32>
    %6 = arith.mulf %4, %5 : vector<128x128xf32>
    %7 = arith.truncf %6 : vector<128x128xf32> to vector<128x128xbf16>
    %c0_3 = arith.constant 0 : index
    %c0_4 = arith.constant 0 : index
    %c0_5 = arith.constant 0 : index
    %8 = vector.load %arg5[%c0_3, %c0_4, %c0_5] : memref<1x128x128xf32, #tpu.memory_space<vmem>>, vector<1x128x128xf32>
    %9 = vector.shape_cast %8 : vector<1x128x128xf32> to vector<128x128xf32>
    %10 = arith.truncf %9 : vector<128x128xf32> to vector<128x128xbf16>
    %cst_6 = arith.constant dense<0.000000e+00> : vector<128x128xf32>
    %11 = tpu.matmul %7, %10, %cst_6 {dimension_numbers = #tpu.dot_dimension_numbers<[1], [1], [0], [0], [0, 0, 1, 0], [], []>} : vector<128x128xbf16>, vector<128x128xbf16>, vector<128x128xf32> -> vector<128x128xf32>
    %c0_7 = arith.constant 0 : index
    %c0_8 = arith.constant 0 : index
    %c0_9 = arith.constant 0 : index
    %12 = vector.load %arg3[%c0_7, %c0_8, %c0_9] : memref<1x128x128xbf16, #tpu.memory_space<vmem>>, vector<1x128x128xbf16>
    %13 = vector.shape_cast %12 : vector<1x128x128xbf16> to vector<128x128xbf16>
    %14 = arith.extf %13 : vector<128x128xbf16> to vector<128x128xf32>
    %15 = arith.addf %11, %14 : vector<128x128xf32>
    %c0_10 = arith.constant 0 : index
    %c0_11 = arith.constant 0 : index
    %16 = vector.load %arg8[%c0_10, %c0_11] : memref<128x1xf32, #tpu.memory_space<vmem>>, vector<128x1xf32>
    %cst_12 = arith.constant dense<0xFF800000> : vector<128xf32>
    %17 = vector.multi_reduction <maximumf>, %15, %cst_12 [1] : vector<128x128xf32> to vector<128xf32>
    %18 = vector.shape_cast %17 : vector<128xf32> to vector<128x1xf32>
    %19 = arith.maximumf %16, %18 : vector<128x1xf32>
    %20 = arith.subf %16, %19 : vector<128x1xf32>
    %21 = math.exp %20 : vector<128x1xf32>
    %22 = vector.broadcast %19 : vector<128x1xf32> to vector<128x128xf32>
    %23 = arith.subf %15, %22 : vector<128x128xf32>
    %24 = math.exp %23 : vector<128x128xf32>
    %c0_13 = arith.constant 0 : index
    %c0_14 = arith.constant 0 : index
    %25 = vector.load %arg9[%c0_13, %c0_14] : memref<128x1xf32, #tpu.memory_space<vmem>>, vector<128x1xf32>
    %26 = arith.mulf %21, %25 : vector<128x1xf32>
    %cst_15 = arith.constant dense<0.000000e+00> : vector<128xf32>
    %27 = vector.multi_reduction <add>, %24, %cst_15 [1] : vector<128x128xf32> to vector<128xf32>
    %28 = vector.shape_cast %27 : vector<128xf32> to vector<128x1xf32>
    %29 = arith.addf %26, %28 : vector<128x1xf32>
    %c0_16 = arith.constant 0 : index
    %c0_17 = arith.constant 0 : index
    %30 = vector.load %arg9[%c0_16, %c0_17] : memref<128x1xf32, #tpu.memory_space<vmem>>, vector<128x1xf32>
    tpu.vector_store %arg9[%c0_16, %c0_17], %29 {strides = array<i32>} : memref<128x1xf32, #tpu.memory_space<vmem>>, vector<128x1xf32>,
    %c0_18 = arith.constant 0 : index
    %c0_19 = arith.constant 0 : index
    %31 = vector.load %arg8[%c0_18, %c0_19] : memref<128x1xf32, #tpu.memory_space<vmem>>, vector<128x1xf32>
    tpu.vector_store %arg8[%c0_18, %c0_19], %19 {strides = array<i32>} : memref<128x1xf32, #tpu.memory_space<vmem>>, vector<128x1xf32>,
    %c0_20 = arith.constant 0 : index
    %c0_21 = arith.constant 0 : index
    %32 = vector.load %arg10[%c0_20, %c0_21] : memref<128x128xf32, #tpu.memory_space<vmem>>, vector<128x128xf32>
    %33 = vector.broadcast %21 : vector<128x1xf32> to vector<128x128xf32>
    %34 = arith.mulf %33, %32 : vector<128x128xf32>
    %35 = arith.truncf %24 : vector<128x128xf32> to vector<128x128xbf16>
    %c0_22 = arith.constant 0 : index
    %c0_23 = arith.constant 0 : index
    %c0_24 = arith.constant 0 : index
    %36 = vector.load %arg6[%c0_22, %c0_23, %c0_24] : memref<1x128x128xf32, #tpu.memory_space<vmem>>, vector<1x128x128xf32>
    %37 = vector.shape_cast %36 : vector<1x128x128xf32> to vector<128x128xf32>
    %38 = arith.truncf %37 : vector<128x128xf32> to vector<128x128xbf16>
    %cst_25 = arith.constant dense<0.000000e+00> : vector<128x128xf32>
    %39 = tpu.matmul %35, %38, %cst_25 {dimension_numbers = #tpu.dot_dimension_numbers<[1], [0], [0], [1], [0, 0, 1, 1], [], []>} : vector<128x128xbf16>, vector<128x128xbf16>, vector<128x128xf32> -> vector<128x128xf32>
    %40 = arith.addf %34, %39 : vector<128x128xf32>
    %c0_26 = arith.constant 0 : index
    %c0_27 = arith.constant 0 : index
    %41 = vector.load %arg10[%c0_26, %c0_27] : memref<128x128xf32, #tpu.memory_space<vmem>>, vector<128x128xf32>
    tpu.vector_store %arg10[%c0_26, %c0_27], %40 {strides = array<i32>} : memref<128x128xf32, #tpu.memory_space<vmem>>, vector<128x128xf32>,
    %c1_i32 = arith.constant 1 : i32
    %42 = arith.cmpi eq, %arg2, %c1_i32 : i32
    %43 = arith.extui %42 : i1 to i32
    %c0_i32_28 = arith.constant 0 : i32
    %44 = arith.cmpi ne, %43, %c0_i32_28 : i32
    scf.if %44 {
      %c0_29 = arith.constant 0 : index
      %c0_30 = arith.constant 0 : index
      %45 = vector.load %arg9[%c0_29, %c0_30] : memref<128x1xf32, #tpu.memory_space<vmem>>, vector<128x1xf32>
      %46 = tpu.reciprocal %45 {approx = true} : vector<128x1xf32> -> vector<128x1xf32>
      %cst_31 = arith.constant 1.000000e+00 : f32
      %47 = vector.broadcast %cst_31 : f32 to vector<128x1xf32>
      %48 = arith.mulf %46, %47 : vector<128x1xf32>
      %c0_32 = arith.constant 0 : index
      %c0_33 = arith.constant 0 : index
      %49 = vector.load %arg10[%c0_32, %c0_33] : memref<128x128xf32, #tpu.memory_space<vmem>>, vector<128x128xf32>
      %50 = vector.broadcast %48 : vector<128x1xf32> to vector<128x128xf32>
      %51 = arith.mulf %49, %50 : vector<128x128xf32>
      %c0_34 = arith.constant 0 : index
      %c0_35 = arith.constant 0 : index
      %c0_36 = arith.constant 0 : index
      %52 = vector.load %arg7[%c0_34, %c0_35, %c0_36] : memref<1x128x128xf32, #tpu.memory_space<vmem>>, vector<1x128x128xf32>
      %53 = vector.shape_cast %52 : vector<1x128x128xf32> to vector<128x128xf32>
      %54 = vector.shape_cast %51 : vector<128x128xf32> to vector<1x128x128xf32>
      tpu.vector_store %arg7[%c0_34, %c0_35, %c0_36], %54 {strides = array<i32>} : memref<1x128x128xf32, #tpu.memory_space<vmem>>, vector<1x128x128xf32>,
    } else {
    }
    return
  }
  func.func @transform_0(%arg0: i32, %arg1: i32, %arg2: i32) -> (i32, i32, i32) {
    %c0_i32 = arith.constant 0 : i32
    %c0_i32_0 = arith.constant 0 : i32
    return %c0_i32, %arg1, %arg2 : i32, i32, i32
  }
  func.func @transform_1(%arg0: i32, %arg1: i32, %arg2: i32) -> (i32, i32, i32) {
    %c0_i32 = arith.constant 0 : i32
    %c0_i32_0 = arith.constant 0 : i32
    return %arg0, %arg1, %c0_i32 : i32, i32, i32
  }
  func.func @transform_2(%arg0: i32, %arg1: i32, %arg2: i32) -> (i32, i32, i32) {
    %c0_i32 = arith.constant 0 : i32
    %c0_i32_0 = arith.constant 0 : i32
    return %arg0, %arg2, %c0_i32 : i32, i32, i32
  }
  func.func @transform_3(%arg0: i32, %arg1: i32, %arg2: i32) -> (i32, i32, i32) {
    %c0_i32 = arith.constant 0 : i32
    %c0_i32_0 = arith.constant 0 : i32
    return %arg0, %arg2, %c0_i32 : i32, i32, i32
  }
  func.func @transform_4(%arg0: i32, %arg1: i32, %arg2: i32) -> (i32, i32, i32) {
    %c0_i32 = arith.constant 0 : i32
    %c0_i32_0 = arith.constant 0 : i32
    return %arg0, %arg1, %c0_i32 : i32, i32, i32
  }
}

</mosaic_0001>

<llo_original>
// kernel: tpu_custom_call.1
$region0: #{tpu_custom_call.1}
  #allocation0 [shape = 'u32[]', space=smem, size = 0x4, offset = 0x4, fixed_abs, tag = 'smem constant byte address 0x4 - core index']
  #allocation1 [shape = 'u32[72,128]{1,0:T(1,128)}', space=vmem, size = 0x9000, scoped, tag = 'internal scratch']
  #allocation2 [shape = 'f32[128,1]{1,0:T(8,128)}', space=vmem, size = 0x10000, scoped, tag = 'scratch operand']
  #allocation3 [shape = 'f32[128,1]{1,0:T(8,128)}', space=vmem, size = 0x10000, scoped, tag = 'scratch operand']
  #allocation4 [shape = 'f32[128,128]{1,0:T(8,128)}', space=vmem, size = 0x10000, scoped, tag = 'scratch operand']
  %s0 = inlined_call_operand.hbm [shape: bf16[1,256,256], index: 0, kind: input, shape index: {}]
  %s1 = inlined_call_operand.hbm [shape: f32[2,256,128], index: 1, kind: input, shape index: {}]
  %s2 = inlined_call_operand.hbm [shape: f32[2,256,128], index: 2, kind: input, shape index: {}]
  %s3 = inlined_call_operand.hbm [shape: f32[2,256,128], index: 3, kind: input, shape index: {}]
  %s4 = inlined_call_operand.hbm [shape: f32[2,256,128], index: 4, kind: output, shape index: {}]
  %s5 = sld [smem:[#allocation0]]
  $region73: #{tpu_custom_call.1} parent=0
    _
  %s7 = ssub.s32 1, %s5
  %s8 = scalar_select 0, %s7, %s5
  $region1: #{tpu_custom_call.1} parent=0
    #allocation5 [shape = 'u8[65536]{0}', space=vmem, size = 0x10000, scoped, tag = 'input window, operand 0']
    #allocation6 [shape = 's32[2]{0}', space=sflag, size = 0x8, scoped, tag = 'scoped memory for tpu_custom_call.1']
    #allocation7 [shape = 's32[2]{0}', space=sflag, size = 0x8, scoped, tag = 'scoped memory for tpu_custom_call.1']
    #allocation8 [shape = 'u8[131072]{0}', space=vmem, size = 0x20000, scoped, tag = 'input window, operand 1']
    #allocation9 [shape = 's32[2]{0}', space=sflag, size = 0x8, scoped, tag = 'scoped memory for tpu_custom_call.1']
    #allocation10 [shape = 'u8[131072]{0}', space=vmem, size = 0x20000, scoped, tag = 'input window, operand 2']
    #allocation11 [shape = 'u8[131072]{0}', space=vmem, size = 0x20000, scoped, tag = 'input window, operand 3']
    #allocation12 [shape = 's32[2]{0}', space=sflag, size = 0x8, scoped, tag = 'scoped memory for tpu_custom_call.1']
    #allocation13 [shape = 'u8[131072]{0}', space=vmem, size = 0x20000, scoped, tag = 'output window, operand 0']
    %9 = vsyncpa [#allocation6], 0
    %s10 = scalar_lea.sflag [#allocation6], 1
    %11 = vsyncpa %s10, 0
    %12 = vsyncpa [#allocation9], 0
    %s13 = scalar_lea.sflag [#allocation9], 1
    %14 = vsyncpa %s13, 0
    %15 = vsyncpa [#allocation12], 0
    %s16 = scalar_lea.sflag [#allocation12], 1
    %17 = vsyncpa %s16, 0
    %18 = vsyncpa [#allocation7], 0
    %s19 = scalar_lea.sflag [#allocation7], 1
    %20 = vsyncpa %s19, 0
    loop: start=0, step=1, limit=10
    $region2: #{tpu_custom_call.1} parent=1 // loop_pre_header
      _
    $region3: #{tpu_custom_call.1} parent=1 // loop_header
      %s22 = sphi 0, %s26
      %p23 = scmp.ge.s32.totalorder %s22, 10
      %s29 = sphi 0, %s48
      %s30 = sphi 0, %s44
      %s31 = sphi 0, %s40
      %s32 = sphi 0, %s29
      %s33 = sphi 0, %s30
      %s34 = sphi 0, %s31
      %s35 = sphi 0, %s32
      %s36 = sphi 0, %s33
      %s37 = sphi 0, %s34
      %s53 = sphi 0, %s55
      %s56 = sphi 0, %s53
      %s57 = sphi 0, %s56
      %s73 = sphi 0, %s57
      %s81 = sphi 0, %s83
      %s84 = sphi 0, %s81
      %s85 = sphi 0, %s84
      %s101 = sphi 0, %s85
      %s109 = sphi 0, %s111
      %s112 = sphi 0, %s109
      %s113 = sphi 0, %s112
      %s129 = sphi 0, %s113
      %s137 = sphi 0, %s139
      %s140 = sphi 0, %s137
      %s141 = sphi 0, %s140
      %s157 = sphi 0, %s141
      %s165 = sphi 0, %s167
      %s168 = sphi 0, %s165
      %s169 = sphi 0, %s168
      %s185 = sphi 0, %s169
    $region4: #{tpu_custom_call.1} parent=1 // loop_header_branch
      %25 = sbr.rel (%p23) target = $region8
    $region5: #{tpu_custom_call.1} parent=1 // loop_body
      %s27 = ssub.s32 %s22, 1
      %s28 = ssub.s32 %s22, 2
      %s38 = sadd.s32 1, %s31
      %p39 = scmp.ge.s32.totalorder %s38, 2
      %s40 = scalar_select %p39, 0, %s38
      %s41 = sadd.s32 1, %s30
      %s42 = scalar_select %p39, %s41, %s30
      %p43 = scmp.ge.s32.totalorder %s42, 2
      %s44 = scalar_select %p43, 0, %s42
      %s45 = sadd.s32 1, %s29
      %s46 = scalar_select %p43, %s45, %s29
      %p47 = scmp.ge.s32.totalorder %s46, 2
      %s48 = scalar_select %p47, 0, %s46
      %s49 = ssub.s32 %s30, %s44
      %s50 = ssub.s32 %s31, %s40
      %s51 = sor.u32 %s49, %s50
      %p52 = scmp.eq.s32.totalorder %s51, 0
      %s54 = sadd.s32 %s53, 1
      %s55 = scalar_select %p52, %s53, %s54
      %p58 = pneg %p52
      %p59 = scmp.eq.s32.totalorder %s22, 7
      %p60 = por %p58, %p59
      %p61 = scmp.ne.s32.totalorder %s53, %s56
      %p62 = scmp.eq.s32.totalorder %s22, 0
      %p63 = por %p61, %p62
      %p64 = scmp.ne.s32.totalorder %s53, %s56
      %p65 = scmp.eq.s32.totalorder %s27, 7
      %p66 = por %p64, %p65
      %p67 = scmp.ne.s32.totalorder %s56, %s57
      %p68 = scmp.eq.s32.totalorder %s27, 0
      %p69 = por %p67, %p68
      %p70 = scmp.ne.s32.totalorder %s56, %s57
      %p71 = scmp.eq.s32.totalorder %s28, 7
      %p72 = por %p70, %p71
      %p74 = scmp.ne.s32.totalorder %s57, %s73
      %p75 = scmp.eq.s32.totalorder %s28, 0
      %p76 = por %p74, %p75
      %s77 = ssub.s32 %s29, %s48
      %s78 = ssub.s32 %s30, %s44
      %s79 = sor.u32 %s77, %s78
      %p80 = scmp.eq.s32.totalorder %s79, 0
      %s82 = sadd.s32 %s81, 1
      %s83 = scalar_select %p80, %s81, %s82
      %p86 = pneg %p80
      %p87 = scmp.eq.s32.totalorder %s22, 7
      %p88 = por %p86, %p87
      %p89 = scmp.ne.s32.totalorder %s81, %s84
      %p90 = scmp.eq.s32.totalorder %s22, 0
      %p91 = por %p89, %p90
      %p92 = scmp.ne.s32.totalorder %s81, %s84
      %p93 = scmp.eq.s32.totalorder %s27, 7
      %p94 = por %p92, %p93
      %p95 = scmp.ne.s32.totalorder %s84, %s85
      %p96 = scmp.eq.s32.totalorder %s27, 0
      %p97 = por %p95, %p96
      %p98 = scmp.ne.s32.totalorder %s84, %s85
      %p99 = scmp.eq.s32.totalorder %s28, 7
      %p100 = por %p98, %p99
      %p102 = scmp.ne.s32.totalorder %s85, %s101
      %p103 = scmp.eq.s32.totalorder %s28, 0
      %p104 = por %p102, %p103
      %s105 = ssub.s32 %s29, %s48
      %s106 = ssub.s32 %s31, %s40
      %s107 = sor.u32 %s105, %s106
      %p108 = scmp.eq.s32.totalorder %s107, 0
      %s110 = sadd.s32 %s109, 1
      %s111 = scalar_select %p108, %s109, %s110
      %p114 = pneg %p108
      %p115 = scmp.eq.s32.totalorder %s22, 7
      %p116 = por %p114, %p115
      %p117 = scmp.ne.s32.totalorder %s109, %s112
      %p118 = scmp.eq.s32.totalorder %s22, 0
      %p119 = por %p117, %p118
      %p120 = scmp.ne.s32.totalorder %s109, %s112
      %p121 = scmp.eq.s32.totalorder %s27, 7
      %p122 = por %p120, %p121
      %p123 = scmp.ne.s32.totalorder %s112, %s113
      %p124 = scmp.eq.s32.totalorder %s27, 0
      %p125 = por %p123, %p124
      %p126 = scmp.ne.s32.totalorder %s112, %s113
      %p127 = scmp.eq.s32.totalorder %s28, 7
      %p128 = por %p126, %p127
      %p130 = scmp.ne.s32.totalorder %s113, %s129
      %p131 = scmp.eq.s32.totalorder %s28, 0
      %p132 = por %p130, %p131
      %s133 = ssub.s32 %s29, %s48
      %s134 = ssub.s32 %s31, %s40
      %s135 = sor.u32 %s133, %s134
      %p136 = scmp.eq.s32.totalorder %s135, 0
      %s138 = sadd.s32 %s137, 1
      %s139 = scalar_select %p136, %s137, %s138
      %p142 = pneg %p136
      %p143 = scmp.eq.s32.totalorder %s22, 7
      %p144 = por %p142, %p143
      %p145 = scmp.ne.s32.totalorder %s137, %s140
      %p146 = scmp.eq.s32.totalorder %s22, 0
      %p147 = por %p145, %p146
      %p148 = scmp.ne.s32.totalorder %s137, %s140
      %p149 = scmp.eq.s32.totalorder %s27, 7
      %p150 = por %p148, %p149
      %p151 = scmp.ne.s32.totalorder %s140, %s141
      %p152 = scmp.eq.s32.totalorder %s27, 0
      %p153 = por %p151, %p152
      %p154 = scmp.ne.s32.totalorder %s140, %s141
      %p155 = scmp.eq.s32.totalorder %s28, 7
      %p156 = por %p154, %p155
      %p158 = scmp.ne.s32.totalorder %s141, %s157
      %p159 = scmp.eq.s32.totalorder %s28, 0
      %p160 = por %p158, %p159
      %s161 = ssub.s32 %s29, %s48
      %s162 = ssub.s32 %s30, %s44
      %s163 = sor.u32 %s161, %s162
      %p164 = scmp.eq.s32.totalorder %s163, 0
      %s166 = sadd.s32 %s165, 1
      %s167 = scalar_select %p164, %s165, %s166
      %p170 = pneg %p164
      %p171 = scmp.eq.s32.totalorder %s22, 7
      %p172 = por %p170, %p171
      %p173 = scmp.ne.s32.totalorder %s165, %s168
      %p174 = scmp.eq.s32.totalorder %s22, 0
      %p175 = por %p173, %p174
      %p176 = scmp.ne.s32.totalorder %s165, %s168
      %p177 = scmp.eq.s32.totalorder %s27, 7
      %p178 = por %p176, %p177
      %p179 = scmp.ne.s32.totalorder %s168, %s169
      %p180 = scmp.eq.s32.totalorder %s27, 0
      %p181 = por %p179, %p180
      %p182 = scmp.ne.s32.totalorder %s168, %s169
      %p183 = scmp.eq.s32.totalorder %s28, 7
      %p184 = por %p182, %p183
      %p186 = scmp.ne.s32.totalorder %s169, %s185
      %p187 = scmp.eq.s32.totalorder %s28, 0
      %p188 = por %p186, %p187
      %p189 = scmp.le.s32.totalorder 1, %s22
      %p190 = scmp.lt.s32.totalorder %s22, 9
      %p191 = pnand %p189, %p190
      %p192 = pneg %p191
      // Predicated region
      $region9: #{tpu_custom_call.1} parent=5 // pred_check
        _
      $region10: #{tpu_custom_call.1} parent=5 // pred_check_branch
        %194 = sbr.rel (%p191) target = $region12
      $region11: #{tpu_custom_call.1} parent=5 // pred_region
        %s195 = ssub.s32 %s22, 1
      $region12: #{tpu_custom_call.1} parent=5 // pred_fallthru
        _
      %p196 = scmp.lt.s32.totalorder %s22, 8
      // Predicated region
      $region13: #{tpu_custom_call.1} parent=5 // pred_check
        %p197 = pneg %p196
      $region14: #{tpu_custom_call.1} parent=5 // pred_check_branch
        %199 = sbr.rel (%p197) target = $region16
      $region15: #{tpu_custom_call.1} parent=5 // pred_region
        // Predicated region
        $region17: #{tpu_custom_call.1} parent=15 // pred_check
          %p200 = pneg %p63
        $region18: #{tpu_custom_call.1} parent=15 // pred_check_branch
          %202 = sbr.rel (%p200) target = $region20
        $region19: #{tpu_custom_call.1} parent=15 // pred_region
          %s203 = sand.u32 %s53, 1
          %s204 = scalar_lea.sflag [#allocation6], %s203
          %s205 = sand.u32 %s53, 1
          %s206 = smul.addr %s205, 64
          %s207 = scalar_lea.vmem [#allocation5], %s206
          %s208 = smul.u32 16, %s30
          %210 = vsyncadd %s204, 0
          %s211 = smul.addr %s208, 2
          %s212 = sadd.s32 %s31, %s211
          %s213 = smul.addr %s212, 4
          %s214 = scalar_lea.hbm %s0, %s213
          %s215 = sshll.u32 %s214, 4
          %s216 = int_to_ptr.hbm [resolvable:$true] %s215
          %s217 = sshll.u32 %s207, 4
          %s218 = int_to_ptr.vmem [resolvable:$true] %s217
          %223 = dma.hbm_to_vmem [thread:$0]  %s216, 1024, %s218, %s204, 128, 64, 4
        $region20: #{tpu_custom_call.1} parent=15 // pred_fallthru
          _
        // Predicated region
        $region21: #{tpu_custom_call.1} parent=15 // pred_check
          %p224 = pneg %p91
        $region22: #{tpu_custom_call.1} parent=15 // pred_check_branch
          %226 = sbr.rel (%p224) target = $region24
        $region23: #{tpu_custom_call.1} parent=15 // pred_region
          %s227 = sand.u32 %s22, 1
          %s228 = scalar_lea.sflag [#allocation9], %s227
          %s229 = sand.u32 %s81, 1
          %s230 = smul.addr %s229, 128
          %s231 = scalar_lea.vmem [#allocation8], %s230
          %s232 = smul.u32 16, %s30
          %234 = vsyncadd %s228, 0
          %s235 = smul.addr %s29, 32
          %s236 = sadd.s32 %s232, %s235
          %s237 = smul.addr %s236, 8
          %s238 = scalar_lea.hbm %s1, %s237
          %s239 = sshll.u32 %s238, 4
          %s240 = int_to_ptr.hbm [resolvable:$true] %s239
          %s241 = sshll.u32 %s231, 4
          %s242 = int_to_ptr.vmem [resolvable:$true] %s241
          %247 = dma.hbm_to_vmem [thread:$0]  %s240, 2048, %s242, %s228, 128, 128, 8
        $region24: #{tpu_custom_call.1} parent=15 // pred_fallthru
          _
        // Predicated region
        $region25: #{tpu_custom_call.1} parent=15 // pred_check
          %p248 = pneg %p119
        $region26: #{tpu_custom_call.1} parent=15 // pred_check_branch
          %250 = sbr.rel (%p248) target = $region28
        $region27: #{tpu_custom_call.1} parent=15 // pred_region
          %s251 = sand.u32 %s22, 1
          %s252 = scalar_lea.sflag [#allocation9], %s251
          %s253 = sand.u32 %s109, 1
          %s254 = smul.addr %s253, 128
          %s255 = scalar_lea.vmem [#allocation10], %s254
          %s256 = smul.u32 16, %s31
          %258 = vsyncadd %s252, 0
          %s259 = smul.addr %s29, 32
          %s260 = sadd.s32 %s256, %s259
          %s261 = smul.addr %s260, 8
          %s262 = scalar_lea.hbm %s2, %s261
          %s263 = sshll.u32 %s262, 4
          %s264 = int_to_ptr.hbm [resolvable:$true] %s263
          %s265 = sshll.u32 %s255, 4
          %s266 = int_to_ptr.vmem [resolvable:$true] %s265
          %271 = dma.hbm_to_vmem [thread:$0]  %s264, 2048, %s266, %s252, 128, 128, 8
        $region28: #{tpu_custom_call.1} parent=15 // pred_fallthru
          _
        // Predicated region
        $region29: #{tpu_custom_call.1} parent=15 // pred_check
          %p272 = pneg %p147
        $region30: #{tpu_custom_call.1} parent=15 // pred_check_branch
          %274 = sbr.rel (%p272) target = $region32
        $region31: #{tpu_custom_call.1} parent=15 // pred_region
          %s275 = sand.u32 %s137, 1
          %s276 = scalar_lea.sflag [#allocation12], %s275
          %s277 = sand.u32 %s137, 1
          %s278 = smul.addr %s277, 128
          %s279 = scalar_lea.vmem [#allocation11], %s278
          %s280 = smul.u32 16, %s31
          %282 = vsyncadd %s276, 0
          %s283 = smul.addr %s29, 32
          %s284 = sadd.s32 %s280, %s283
          %s285 = smul.addr %s284, 8
          %s286 = scalar_lea.hbm %s3, %s285
          %s287 = sshll.u32 %s286, 4
          %s288 = int_to_ptr.hbm [resolvable:$true] %s287
          %s289 = sshll.u32 %s279, 4
          %s290 = int_to_ptr.vmem [resolvable:$true] %s289
          %295 = dma.hbm_to_vmem [thread:$0]  %s288, 2048, %s290, %s276, 128, 128, 8
        $region32: #{tpu_custom_call.1} parent=15 // pred_fallthru
          _
      $region16: #{tpu_custom_call.1} parent=5 // pred_fallthru
        _
      %p296 = scmp.le.s32.totalorder 1, %s22
      %p297 = scmp.lt.s32.totalorder %s22, 9
      %p298 = pnand %p296, %p297
      %p299 = pneg %p298
      // Predicated region
      $region33: #{tpu_custom_call.1} parent=5 // pred_check
        _
      $region34: #{tpu_custom_call.1} parent=5 // pred_check_branch
        %301 = sbr.rel (%p298) target = $region36
      $region35: #{tpu_custom_call.1} parent=5 // pred_region
        %s302 = ssub.s32 %s22, 1
        %s303 = sand.u32 %s56, 1
        %s304 = scalar_lea.sflag [#allocation6], %s303
        %s305 = sand.u32 %s56, 1
        %s306 = smul.addr %s305, 64
        %s307 = scalar_lea.vmem [#allocation5], %s306
        // Predicated region
        $region37: #{tpu_custom_call.1} parent=35 // pred_check
          %p308 = pneg %p69
        $region38: #{tpu_custom_call.1} parent=35 // pred_check_branch
          %310 = sbr.rel (%p308) target = $region40
        $region39: #{tpu_custom_call.1} parent=35 // pred_region
          %312 = dma.done %s304, 1024
        $region40: #{tpu_custom_call.1} parent=35 // pred_fallthru
          _
        %s313 = sand.u32 %s27, 1
        %s314 = scalar_lea.sflag [#allocation9], %s313
        %s315 = sand.u32 %s84, 1
        %s316 = smul.addr %s315, 128
        %s317 = scalar_lea.vmem [#allocation8], %s316
        // Predicated region
        $region41: #{tpu_custom_call.1} parent=35 // pred_check
          %p318 = pneg %p97
        $region42: #{tpu_custom_call.1} parent=35 // pred_check_branch
          %320 = sbr.rel (%p318) target = $region44
        $region43: #{tpu_custom_call.1} parent=35 // pred_region
          %322 = dma.done %s314, 2048
        $region44: #{tpu_custom_call.1} parent=35 // pred_fallthru
          _
        %s323 = sand.u32 %s27, 1
        %s324 = scalar_lea.sflag [#allocation9], %s323
        %s325 = sand.u32 %s112, 1
        %s326 = smul.addr %s325, 128
        %s327 = scalar_lea.vmem [#allocation10], %s326
        // Predicated region
        $region45: #{tpu_custom_call.1} parent=35 // pred_check
          %p328 = pneg %p125
        $region46: #{tpu_custom_call.1} parent=35 // pred_check_branch
          %330 = sbr.rel (%p328) target = $region48
        $region47: #{tpu_custom_call.1} parent=35 // pred_region
          %332 = dma.done %s324, 2048
        $region48: #{tpu_custom_call.1} parent=35 // pred_fallthru
          _
        %s333 = sand.u32 %s140, 1
        %s334 = scalar_lea.sflag [#allocation12], %s333
        %s335 = sand.u32 %s140, 1
        %s336 = smul.addr %s335, 128
        %s337 = scalar_lea.vmem [#allocation11], %s336
        // Predicated region
        $region49: #{tpu_custom_call.1} parent=35 // pred_check
          %p338 = pneg %p153
        $region50: #{tpu_custom_call.1} parent=35 // pred_check_branch
          %340 = sbr.rel (%p338) target = $region52
        $region51: #{tpu_custom_call.1} parent=35 // pred_region
          %342 = dma.done %s334, 2048
        $region52: #{tpu_custom_call.1} parent=35 // pred_fallthru
          _
        %s343 = sand.u32 %s56, 1
        %s344 = scalar_lea.sflag [#allocation6], %s343
        %s345 = sand.u32 %s56, 1
        %s346 = smul.addr %s345, 64
        %s347 = scalar_lea.vmem [#allocation5], %s346
        %p348 = pneg %p69
        %p349 = pneg %p66
        %s350 = sand.u32 %s27, 1
        %s351 = scalar_lea.sflag [#allocation9], %s350
        %s352 = sand.u32 %s84, 1
        %s353 = smul.addr %s352, 128
        %s354 = scalar_lea.vmem [#allocation8], %s353
        %p355 = pneg %p97
        %p356 = pneg %p94
        %s357 = sand.u32 %s27, 1
        %s358 = scalar_lea.sflag [#allocation9], %s357
        %s359 = sand.u32 %s112, 1
        %s360 = smul.addr %s359, 128
        %s361 = scalar_lea.vmem [#allocation10], %s360
        %p362 = pneg %p125
        %p363 = pneg %p122
        %s364 = sand.u32 %s140, 1
        %s365 = scalar_lea.sflag [#allocation12], %s364
        %s366 = sand.u32 %s140, 1
        %s367 = smul.addr %s366, 128
        %s368 = scalar_lea.vmem [#allocation11], %s367
        %p369 = pneg %p153
        %p370 = pneg %p150
        %p371 = pneg %p181
        %p372 = pneg %p178
        %s373 = sand.u32 %s168, 1
        %s374 = scalar_lea.sflag [#allocation7], %s373
        %s375 = sand.u32 %s168, 1
        %s376 = smul.addr %s375, 128
        %s377 = scalar_lea.vmem [#allocation13], %s376
        %s378 = smul.u32 16, %s33
        %s379 = smul.u32 16, %s33
        %s380 = smul.u32 16, %s34
        %s381 = smul.u32 16, %s34
        %s382 = smul.u32 16, %s33
        %p383 = scmp.eq.s32.totalorder %s34, 0
        // Predicated region
        $region53: #{tpu_custom_call.1} parent=35 // pred_check
          %p384 = pneg %p383
        $region54: #{tpu_custom_call.1} parent=35 // pred_check_branch
          %386 = sbr.rel (%p384) target = $region56
        $region55: #{tpu_custom_call.1} parent=35 // pred_region
          %vm387 = vcmask 7168
          %388 = vst.msk [vmem:[#allocation2] sm:$0xff] %vm387, -1e+30
          %389 = vst.msk [vmem:[#allocation2 + $0x8] sm:$0xff] %vm387, -1e+30
          %390 = vst.msk [vmem:[#allocation2 + $0x10] sm:$0xff] %vm387, -1e+30
          %391 = vst.msk [vmem:[#allocation2 + $0x18] sm:$0xff] %vm387, -1e+30
          %392 = vst.msk [vmem:[#allocation2 + $0x20] sm:$0xff] %vm387, -1e+30
          %393 = vst.msk [vmem:[#allocation2 + $0x28] sm:$0xff] %vm387, -1e+30
          %394 = vst.msk [vmem:[#allocation2 + $0x30] sm:$0xff] %vm387, -1e+30
          %395 = vst.msk [vmem:[#allocation2 + $0x38] sm:$0xff] %vm387, -1e+30
          %396 = vst.msk [vmem:[#allocation2 + $0x40] sm:$0xff] %vm387, -1e+30
          %397 = vst.msk [vmem:[#allocation2 + $0x48] sm:$0xff] %vm387, -1e+30
          %398 = vst.msk [vmem:[#allocation2 + $0x50] sm:$0xff] %vm387, -1e+30
          %399 = vst.msk [vmem:[#allocation2 + $0x58] sm:$0xff] %vm387, -1e+30
          %400 = vst.msk [vmem:[#allocation2 + $0x60] sm:$0xff] %vm387, -1e+30
          %401 = vst.msk [vmem:[#allocation2 + $0x68] sm:$0xff] %vm387, -1e+30
          %402 = vst.msk [vmem:[#allocation2 + $0x70] sm:$0xff] %vm387, -1e+30
          %403 = vst.msk [vmem:[#allocation2 + $0x78] sm:$0xff] %vm387, -1e+30
          %404 = vst.msk [vmem:[#allocation3] sm:$0xff] %vm387, 0.0
          %405 = vst.msk [vmem:[#allocation3 + $0x8] sm:$0xff] %vm387, 0.0
          %406 = vst.msk [vmem:[#allocation3 + $0x10] sm:$0xff] %vm387, 0.0
          %407 = vst.msk [vmem:[#allocation3 + $0x18] sm:$0xff] %vm387, 0.0
          %408 = vst.msk [vmem:[#allocation3 + $0x20] sm:$0xff] %vm387, 0.0
          %409 = vst.msk [vmem:[#allocation3 + $0x28] sm:$0xff] %vm387, 0.0
          %410 = vst.msk [vmem:[#allocation3 + $0x30] sm:$0xff] %vm387, 0.0
          %411 = vst.msk [vmem:[#allocation3 + $0x38] sm:$0xff] %vm387, 0.0
          %412 = vst.msk [vmem:[#allocation3 + $0x40] sm:$0xff] %vm387, 0.0
          %413 = vst.msk [vmem:[#allocation3 + $0x48] sm:$0xff] %vm387, 0.0
          %414 = vst.msk [vmem:[#allocation3 + $0x50] sm:$0xff] %vm387, 0.0
          %415 = vst.msk [vmem:[#allocation3 + $0x58] sm:$0xff] %vm387, 0.0
          %416 = vst.msk [vmem:[#allocation3 + $0x60] sm:$0xff] %vm387, 0.0
          %417 = vst.msk [vmem:[#allocation3 + $0x68] sm:$0xff] %vm387, 0.0
          %418 = vst.msk [vmem:[#allocation3 + $0x70] sm:$0xff] %vm387, 0.0
          %419 = vst.msk [vmem:[#allocation3 + $0x78] sm:$0xff] %vm387, 0.0
          %420 = vst [vmem:[#allocation4] sm:$0xff] 0.0
          %421 = vst [vmem:[#allocation4 + $0x8] sm:$0xff] 0.0
          %422 = vst [vmem:[#allocation4 + $0x10] sm:$0xff] 0.0
          %423 = vst [vmem:[#allocation4 + $0x18] sm:$0xff] 0.0
          %424 = vst [vmem:[#allocation4 + $0x20] sm:$0xff] 0.0
          %425 = vst [vmem:[#allocation4 + $0x28] sm:$0xff] 0.0
          %426 = vst [vmem:[#allocation4 + $0x30] sm:$0xff] 0.0
          %427 = vst [vmem:[#allocation4 + $0x38] sm:$0xff] 0.0
          %428 = vst [vmem:[#allocation4 + $0x40] sm:$0xff] 0.0
          %429 = vst [vmem:[#allocation4 + $0x48] sm:$0xff] 0.0
          %430 = vst [vmem:[#allocation4 + $0x50] sm:$0xff] 0.0
          %431 = vst [vmem:[#allocation4 + $0x58] sm:$0xff] 0.0
          %432 = vst [vmem:[#allocation4 + $0x60] sm:$0xff] 0.0
          %433 = vst [vmem:[#allocation4 + $0x68] sm:$0xff] 0.0
          %434 = vst [vmem:[#allocation4 + $0x70] sm:$0xff] 0.0
          %435 = vst [vmem:[#allocation4 + $0x78] sm:$0xff] 0.0
        $region56: #{tpu_custom_call.1} parent=35 // pred_fallthru
          _
        %v436 = vld [vmem:[%s317] sm:$0xff]
        %v437 = vld [vmem:[%s317 + $0x8] sm:$0xff]
        %v438 = vld [vmem:[%s317 + $0x10] sm:$0xff]
        %v439 = vld [vmem:[%s317 + $0x18] sm:$0xff]
        %v440 = vld [vmem:[%s317 + $0x20] sm:$0xff]
        %v441 = vld [vmem:[%s317 + $0x28] sm:$0xff]
        %v442 = vld [vmem:[%s317 + $0x30] sm:$0xff]
        %v443 = vld [vmem:[%s317 + $0x38] sm:$0xff]
        %v444 = vld [vmem:[%s317 + $0x40] sm:$0xff]
        %v445 = vld [vmem:[%s317 + $0x48] sm:$0xff]
        %v446 = vld [vmem:[%s317 + $0x50] sm:$0xff]
        %v447 = vld [vmem:[%s317 + $0x58] sm:$0xff]
        %v448 = vld [vmem:[%s317 + $0x60] sm:$0xff]
        %v449 = vld [vmem:[%s317 + $0x68] sm:$0xff]
        %v450 = vld [vmem:[%s317 + $0x70] sm:$0xff]
        %v451 = vld [vmem:[%s317 + $0x78] sm:$0xff]
        %v452 = vmul.f32 %v436, 0.088388346
        %v453 = vmul.f32 %v437, 0.088388346
        %v454 = vmul.f32 %v438, 0.088388346
        %v455 = vmul.f32 %v439, 0.088388346
        %v456 = vmul.f32 %v440, 0.088388346
        %v457 = vmul.f32 %v441, 0.088388346
        %v458 = vmul.f32 %v442, 0.088388346
        %v459 = vmul.f32 %v443, 0.088388346
        %v460 = vmul.f32 %v444, 0.088388346
        %v461 = vmul.f32 %v445, 0.088388346
        %v462 = vmul.f32 %v446, 0.088388346
        %v463 = vmul.f32 %v447, 0.088388346
        %v464 = vmul.f32 %v448, 0.088388346
        %v465 = vmul.f32 %v449, 0.088388346
        %v466 = vmul.f32 %v450, 0.088388346
        %v467 = vmul.f32 %v451, 0.088388346
        %v468 = vpack.c.bf16 %v453, %v452
        %v469 = vpack.c.bf16 %v455, %v454
        %v470 = vpack.c.bf16 %v457, %v456
        %v471 = vpack.c.bf16 %v459, %v458
        %v472 = vpack.c.bf16 %v461, %v460
        %v473 = vpack.c.bf16 %v463, %v462
        %v474 = vpack.c.bf16 %v465, %v464
        %v475 = vpack.c.bf16 %v467, %v466
        %v476 = vld [vmem:[%s327] sm:$0xff]
        %v477 = vld [vmem:[%s327 + $0x8] sm:$0xff]
        %v478 = vld [vmem:[%s327 + $0x10] sm:$0xff]
        %v479 = vld [vmem:[%s327 + $0x18] sm:$0xff]
        %v480 = vld [vmem:[%s327 + $0x20] sm:$0xff]
        %v481 = vld [vmem:[%s327 + $0x28] sm:$0xff]
        %v482 = vld [vmem:[%s327 + $0x30] sm:$0xff]
        %v483 = vld [vmem:[%s327 + $0x38] sm:$0xff]
        %v484 = vld [vmem:[%s327 + $0x40] sm:$0xff]
        %v485 = vld [vmem:[%s327 + $0x48] sm:$0xff]
        %v486 = vld [vmem:[%s327 + $0x50] sm:$0xff]
        %v487 = vld [vmem:[%s327 + $0x58] sm:$0xff]
        %v488 = vld [vmem:[%s327 + $0x60] sm:$0xff]
        %v489 = vld [vmem:[%s327 + $0x68] sm:$0xff]
        %v490 = vld [vmem:[%s327 + $0x70] sm:$0xff]
        %v491 = vld [vmem:[%s327 + $0x78] sm:$0xff]
        %v492 = vpack.c.bf16 %v477, %v476
        %v493 = vpack.c.bf16 %v479, %v478
        %v494 = vpack.c.bf16 %v481, %v480
        %v495 = vpack.c.bf16 %v483, %v482
        %v496 = vpack.c.bf16 %v485, %v484
        %v497 = vpack.c.bf16 %v487, %v486
        %v498 = vpack.c.bf16 %v489, %v488
        %v499 = vpack.c.bf16 %v491, %v490
        %v500 = vld [vmem:[%s307] sm:$0xf]
        %v501 = vld [vmem:[%s307 + $0x4] sm:$0xf]
        %v502 = vld [vmem:[%s307 + $0x8] sm:$0xf]
        %v503 = vld [vmem:[%s307 + $0xc] sm:$0xf]
        %v504 = vld [vmem:[%s307 + $0x10] sm:$0xf]
        %v505 = vld [vmem:[%s307 + $0x14] sm:$0xf]
        %v506 = vld [vmem:[%s307 + $0x18] sm:$0xf]
        %v507 = vld [vmem:[%s307 + $0x1c] sm:$0xf]
        %v508 = vld [vmem:[%s307 + $0x20] sm:$0xf]
        %v509 = vld [vmem:[%s307 + $0x24] sm:$0xf]
        %v510 = vld [vmem:[%s307 + $0x28] sm:$0xf]
        %v511 = vld [vmem:[%s307 + $0x2c] sm:$0xf]
        %v512 = vld [vmem:[%s307 + $0x30] sm:$0xf]
        %v513 = vld [vmem:[%s307 + $0x34] sm:$0xf]
        %v514 = vld [vmem:[%s307 + $0x38] sm:$0xf]
        %v515 = vld [vmem:[%s307 + $0x3c] sm:$0xf]
        %v516 = vunpack.c.l.bf16 %v500
        %v517 = vunpack.c.l.bf16 %v501
        %v518 = vunpack.c.l.bf16 %v502
        %v519 = vunpack.c.l.bf16 %v503
        %v520 = vunpack.c.l.bf16 %v504
        %v521 = vunpack.c.l.bf16 %v505
        %v522 = vunpack.c.l.bf16 %v506
        %v523 = vunpack.c.l.bf16 %v507
        %v524 = vunpack.c.l.bf16 %v508
        %v525 = vunpack.c.l.bf16 %v509
        %v526 = vunpack.c.l.bf16 %v510
        %v527 = vunpack.c.l.bf16 %v511
        %v528 = vunpack.c.l.bf16 %v512
        %v529 = vunpack.c.l.bf16 %v513
        %v530 = vunpack.c.l.bf16 %v514
        %v531 = vunpack.c.l.bf16 %v515
        %532 = vmatpush.bf16.xpose.msra.mxu0 %v499
        %533 = vmatpush.bf16.xpose.msra.mxu0 %v498
        %534 = vmatpush.bf16.xpose.msra.mxu0 %v497
        %535 = vmatpush.bf16.xpose.msra.mxu0 %v496
        %536 = vmatpush.bf16.xpose.msra.mxu0 %v495
        %537 = vmatpush.bf16.xpose.msra.mxu0 %v494
        %538 = vmatpush.bf16.xpose.msra.mxu0 %v493
        %539 = vmatpush.bf16.xpose.msra.mxu0 %v492
        %540 = vmatmul.bf16.gmra.mxu0 %v468
        %v541 = vpop.f32.mrf.mxu0
        %v542 = vadd.f32 %v516, %v541
        %v543 = vpop.f32.mrf.mxu0
        %v544 = vadd.f32 %v517, %v543
        %545 = vmatmul.bf16.gmra.mxu0 %v469
        %v546 = vpop.f32.mrf.mxu0
        %v547 = vadd.f32 %v518, %v546
        %v548 = vpop.f32.mrf.mxu0
        %v549 = vadd.f32 %v519, %v548
        %550 = vmatmul.bf16.gmra.mxu0 %v470
        %v551 = vpop.f32.mrf.mxu0
        %v552 = vadd.f32 %v520, %v551
        %v553 = vpop.f32.mrf.mxu0
        %v554 = vadd.f32 %v521, %v553
        %555 = vmatmul.bf16.gmra.mxu0 %v471
        %v556 = vpop.f32.mrf.mxu0
        %v557 = vadd.f32 %v522, %v556
        %v558 = vpop.f32.mrf.mxu0
        %v559 = vadd.f32 %v523, %v558
        %560 = vmatmul.bf16.gmra.mxu0 %v472
        %v561 = vpop.f32.mrf.mxu0
        %v562 = vadd.f32 %v524, %v561
        %v563 = vpop.f32.mrf.mxu0
        %v564 = vadd.f32 %v525, %v563
        %565 = vmatmul.bf16.gmra.mxu0 %v473
        %v566 = vpop.f32.mrf.mxu0
        %v567 = vadd.f32 %v526, %v566
        %v568 = vpop.f32.mrf.mxu0
        %v569 = vadd.f32 %v527, %v568
        %570 = vmatmul.bf16.gmra.mxu0 %v474
        %v571 = vpop.f32.mrf.mxu0
        %v572 = vadd.f32 %v528, %v571
        %v573 = vpop.f32.mrf.mxu0
        %v574 = vadd.f32 %v529, %v573
        %575 = vmatmul.bf16.gmra.mxu0 %v475
        %v576 = vpop.f32.mrf.mxu0
        %v577 = vadd.f32 %v530, %v576
        %v578 = vpop.f32.mrf.mxu0
        %v579 = vadd.f32 %v531, %v578
        %580 = vdwg.mxu0
        %v581 = vld [vmem:[#allocation2] sm:$0xff]
        %v582 = vld [vmem:[#allocation2 + $0x8] sm:$0xff]
        %v583 = vld [vmem:[#allocation2 + $0x10] sm:$0xff]
        %v584 = vld [vmem:[#allocation2 + $0x18] sm:$0xff]
        %v585 = vld [vmem:[#allocation2 + $0x20] sm:$0xff]
        %v586 = vld [vmem:[#allocation2 + $0x28] sm:$0xff]
        %v587 = vld [vmem:[#allocation2 + $0x30] sm:$0xff]
        %v588 = vld [vmem:[#allocation2 + $0x38] sm:$0xff]
        %v589 = vld [vmem:[#allocation2 + $0x40] sm:$0xff]
        %v590 = vld [vmem:[#allocation2 + $0x48] sm:$0xff]
        %v591 = vld [vmem:[#allocation2 + $0x50] sm:$0xff]
        %v592 = vld [vmem:[#allocation2 + $0x58] sm:$0xff]
        %v593 = vld [vmem:[#allocation2 + $0x60] sm:$0xff]
        %v594 = vld [vmem:[#allocation2 + $0x68] sm:$0xff]
        %v595 = vld [vmem:[#allocation2 + $0x70] sm:$0xff]
        %v596 = vld [vmem:[#allocation2 + $0x78] sm:$0xff]
        %597 = vmax.xlane.f32.xlu0 %v542
        %v598 = vpop.xlane.xlu0 %597
        %599 = vmax.xlane.f32.xlu0 %v544
        %v600 = vpop.xlane.xlu0 %599
        %601 = vmax.xlane.f32.xlu0 %v547
        %v602 = vpop.xlane.xlu0 %601
        %603 = vmax.xlane.f32.xlu0 %v549
        %v604 = vpop.xlane.xlu0 %603
        %605 = vmax.xlane.f32.xlu0 %v552
        %v606 = vpop.xlane.xlu0 %605
        %607 = vmax.xlane.f32.xlu0 %v554
        %v608 = vpop.xlane.xlu0 %607
        %609 = vmax.xlane.f32.xlu0 %v557
        %v610 = vpop.xlane.xlu0 %609
        %611 = vmax.xlane.f32.xlu0 %v559
        %v612 = vpop.xlane.xlu0 %611
        %613 = vmax.xlane.f32.xlu0 %v562
        %v614 = vpop.xlane.xlu0 %613
        %615 = vmax.xlane.f32.xlu0 %v564
        %v616 = vpop.xlane.xlu0 %615
        %617 = vmax.xlane.f32.xlu0 %v567
        %v618 = vpop.xlane.xlu0 %617
        %619 = vmax.xlane.f32.xlu0 %v569
        %v620 = vpop.xlane.xlu0 %619
        %621 = vmax.xlane.f32.xlu0 %v572
        %v622 = vpop.xlane.xlu0 %621
        %623 = vmax.xlane.f32.xlu0 %v574
        %v624 = vpop.xlane.xlu0 %623
        %625 = vmax.xlane.f32.xlu0 %v577
        %v626 = vpop.xlane.xlu0 %625
        %627 = vmax.xlane.f32.xlu0 %v579
        %v628 = vpop.xlane.xlu0 %627
        %v629 = vmax.f32 %v581, %v598
        %v630 = vmax.f32 %v582, %v600
        %v631 = vmax.f32 %v583, %v602
        %v632 = vmax.f32 %v584, %v604
        %v633 = vmax.f32 %v585, %v606
        %v634 = vmax.f32 %v586, %v608
        %v635 = vmax.f32 %v587, %v610
        %v636 = vmax.f32 %v588, %v612
        %v637 = vmax.f32 %v589, %v614
        %v638 = vmax.f32 %v590, %v616
        %v639 = vmax.f32 %v591, %v618
        %v640 = vmax.f32 %v592, %v620
        %v641 = vmax.f32 %v593, %v622
        %v642 = vmax.f32 %v594, %v624
        %v643 = vmax.f32 %v595, %v626
        %v644 = vmax.f32 %v596, %v628
        %v645 = vsub.f32 %v581, %v629
        %v646 = vsub.f32 %v582, %v630
        %v647 = vsub.f32 %v583, %v631
        %v648 = vsub.f32 %v584, %v632
        %v649 = vsub.f32 %v585, %v633
        %v650 = vsub.f32 %v586, %v634
        %v651 = vsub.f32 %v587, %v635
        %v652 = vsub.f32 %v588, %v636
        %v653 = vsub.f32 %v589, %v637
        %v654 = vsub.f32 %v590, %v638
        %v655 = vsub.f32 %v591, %v639
        %v656 = vsub.f32 %v592, %v640
        %v657 = vsub.f32 %v593, %v641
        %v658 = vsub.f32 %v594, %v642
        %v659 = vsub.f32 %v595, %v643
        %v660 = vsub.f32 %v596, %v644
        %v661 = vmul.f32 %v645, 1.442695
        %v662 = vpow.pop %v661
        %v663 = vmul.f32 %v646, 1.442695
        %v664 = vpow.pop %v663
        %v665 = vmul.f32 %v647, 1.442695
        %v666 = vpow.pop %v665
        %v667 = vmul.f32 %v648, 1.442695
        %v668 = vpow.pop %v667
        %v669 = vmul.f32 %v649, 1.442695
        %v670 = vpow.pop %v669
        %v671 = vmul.f32 %v650, 1.442695
        %v672 = vpow.pop %v671
        %v673 = vmul.f32 %v651, 1.442695
        %v674 = vpow.pop %v673
        %v675 = vmul.f32 %v652, 1.442695
        %v676 = vpow.pop %v675
        %v677 = vmul.f32 %v653, 1.442695
        %v678 = vpow.pop %v677
        %v679 = vmul.f32 %v654, 1.442695
        %v680 = vpow.pop %v679
        %v681 = vmul.f32 %v655, 1.442695
        %v682 = vpow.pop %v681
        %v683 = vmul.f32 %v656, 1.442695
        %v684 = vpow.pop %v683
        %v685 = vmul.f32 %v657, 1.442695
        %v686 = vpow.pop %v685
        %v687 = vmul.f32 %v658, 1.442695
        %v688 = vpow.pop %v687
        %v689 = vmul.f32 %v659, 1.442695
        %v690 = vpow.pop %v689
        %v691 = vmul.f32 %v660, 1.442695
        %v692 = vpow.pop %v691
        %694 = vset.pattern.permute.xlu0 0
        %695 = vperm.xlu0 %694, %v629
        %v696 = vpop.permute.xlu0 %695
        %699 = vset.pattern.permute.xlu0 0
        %700 = vperm.xlu0 %699, %v630
        %v701 = vpop.permute.xlu0 %700
        %704 = vset.pattern.permute.xlu0 0
        %705 = vperm.xlu0 %704, %v631
        %v706 = vpop.permute.xlu0 %705
        %709 = vset.pattern.permute.xlu0 0
        %710 = vperm.xlu0 %709, %v632
        %v711 = vpop.permute.xlu0 %710
        %714 = vset.pattern.permute.xlu0 0
        %715 = vperm.xlu0 %714, %v633
        %v716 = vpop.permute.xlu0 %715
        %719 = vset.pattern.permute.xlu0 0
        %720 = vperm.xlu0 %719, %v634
        %v721 = vpop.permute.xlu0 %720
        %724 = vset.pattern.permute.xlu0 0
        %725 = vperm.xlu0 %724, %v635
        %v726 = vpop.permute.xlu0 %725
        %729 = vset.pattern.permute.xlu0 0
        %730 = vperm.xlu0 %729, %v636
        %v731 = vpop.permute.xlu0 %730
        %734 = vset.pattern.permute.xlu0 0
        %735 = vperm.xlu0 %734, %v637
        %v736 = vpop.permute.xlu0 %735
        %739 = vset.pattern.permute.xlu0 0
        %740 = vperm.xlu0 %739, %v638
        %v741 = vpop.permute.xlu0 %740
        %744 = vset.pattern.permute.xlu0 0
        %745 = vperm.xlu0 %744, %v639
        %v746 = vpop.permute.xlu0 %745
        %749 = vset.pattern.permute.xlu0 0
        %750 = vperm.xlu0 %749, %v640
        %v751 = vpop.permute.xlu0 %750
        %754 = vset.pattern.permute.xlu0 0
        %755 = vperm.xlu0 %754, %v641
        %v756 = vpop.permute.xlu0 %755
        %759 = vset.pattern.permute.xlu0 0
        %760 = vperm.xlu0 %759, %v642
        %v761 = vpop.permute.xlu0 %760
        %764 = vset.pattern.permute.xlu0 0
        %765 = vperm.xlu0 %764, %v643
        %v766 = vpop.permute.xlu0 %765
        %769 = vset.pattern.permute.xlu0 0
        %770 = vperm.xlu0 %769, %v644
        %v771 = vpop.permute.xlu0 %770
        %v773 = vsub.f32 %v542, %v696
        %v774 = vsub.f32 %v544, %v701
        %v775 = vsub.f32 %v547, %v706
        %v776 = vsub.f32 %v549, %v711
        %v777 = vsub.f32 %v552, %v716
        %v778 = vsub.f32 %v554, %v721
        %v779 = vsub.f32 %v557, %v726
        %v780 = vsub.f32 %v559, %v731
        %v781 = vsub.f32 %v562, %v736
        %v782 = vsub.f32 %v564, %v741
        %v783 = vsub.f32 %v567, %v746
        %v784 = vsub.f32 %v569, %v751
        %v785 = vsub.f32 %v572, %v756
        %v786 = vsub.f32 %v574, %v761
        %v787 = vsub.f32 %v577, %v766
        %v788 = vsub.f32 %v579, %v771
        %v789 = vmul.f32 %v773, 1.442695
        %v790 = vpow.pop %v789
        %v791 = vmul.f32 %v774, 1.442695
        %v792 = vpow.pop %v791
        %v793 = vmul.f32 %v775, 1.442695
        %v794 = vpow.pop %v793
        %v795 = vmul.f32 %v776, 1.442695
        %v796 = vpow.pop %v795
        %v797 = vmul.f32 %v777, 1.442695
        %v798 = vpow.pop %v797
        %v799 = vmul.f32 %v778, 1.442695
        %v800 = vpow.pop %v799
        %v801 = vmul.f32 %v779, 1.442695
        %v802 = vpow.pop %v801
        %v803 = vmul.f32 %v780, 1.442695
        %v804 = vpow.pop %v803
        %v805 = vmul.f32 %v781, 1.442695
        %v806 = vpow.pop %v805
        %v807 = vmul.f32 %v782, 1.442695
        %v808 = vpow.pop %v807
        %v809 = vmul.f32 %v783, 1.442695
        %v810 = vpow.pop %v809
        %v811 = vmul.f32 %v784, 1.442695
        %v812 = vpow.pop %v811
        %v813 = vmul.f32 %v785, 1.442695
        %v814 = vpow.pop %v813
        %v815 = vmul.f32 %v786, 1.442695
        %v816 = vpow.pop %v815
        %v817 = vmul.f32 %v787, 1.442695
        %v818 = vpow.pop %v817
        %v819 = vmul.f32 %v788, 1.442695
        %v820 = vpow.pop %v819
        %v821 = vld [vmem:[#allocation3] sm:$0xff]
        %v822 = vld [vmem:[#allocation3 + $0x8] sm:$0xff]
        %v823 = vld [vmem:[#allocation3 + $0x10] sm:$0xff]
        %v824 = vld [vmem:[#allocation3 + $0x18] sm:$0xff]
        %v825 = vld [vmem:[#allocation3 + $0x20] sm:$0xff]
        %v826 = vld [vmem:[#allocation3 + $0x28] sm:$0xff]
        %v827 = vld [vmem:[#allocation3 + $0x30] sm:$0xff]
        %v828 = vld [vmem:[#allocation3 + $0x38] sm:$0xff]
        %v829 = vld [vmem:[#allocation3 + $0x40] sm:$0xff]
        %v830 = vld [vmem:[#allocation3 + $0x48] sm:$0xff]
        %v831 = vld [vmem:[#allocation3 + $0x50] sm:$0xff]
        %v832 = vld [vmem:[#allocation3 + $0x58] sm:$0xff]
        %v833 = vld [vmem:[#allocation3 + $0x60] sm:$0xff]
        %v834 = vld [vmem:[#allocation3 + $0x68] sm:$0xff]
        %v835 = vld [vmem:[#allocation3 + $0x70] sm:$0xff]
        %v836 = vld [vmem:[#allocation3 + $0x78] sm:$0xff]
        %v837 = vmul.f32 %v662, %v821
        %v838 = vmul.f32 %v664, %v822
        %v839 = vmul.f32 %v666, %v823
        %v840 = vmul.f32 %v668, %v824
        %v841 = vmul.f32 %v670, %v825
        %v842 = vmul.f32 %v672, %v826
        %v843 = vmul.f32 %v674, %v827
        %v844 = vmul.f32 %v676, %v828
        %v845 = vmul.f32 %v678, %v829
        %v846 = vmul.f32 %v680, %v830
        %v847 = vmul.f32 %v682, %v831
        %v848 = vmul.f32 %v684, %v832
        %v849 = vmul.f32 %v686, %v833
        %v850 = vmul.f32 %v688, %v834
        %v851 = vmul.f32 %v690, %v835
        %v852 = vmul.f32 %v692, %v836
        %853 = vadd.xlane.f32.xlu0 %v790
        %v854 = vpop.xlane.xlu0 %853
        %855 = vadd.xlane.f32.xlu0 %v792
        %v856 = vpop.xlane.xlu0 %855
        %857 = vadd.xlane.f32.xlu0 %v794
        %v858 = vpop.xlane.xlu0 %857
        %859 = vadd.xlane.f32.xlu0 %v796
        %v860 = vpop.xlane.xlu0 %859
        %861 = vadd.xlane.f32.xlu0 %v798
        %v862 = vpop.xlane.xlu0 %861
        %863 = vadd.xlane.f32.xlu0 %v800
        %v864 = vpop.xlane.xlu0 %863
        %865 = vadd.xlane.f32.xlu0 %v802
        %v866 = vpop.xlane.xlu0 %865
        %867 = vadd.xlane.f32.xlu0 %v804
        %v868 = vpop.xlane.xlu0 %867
        %869 = vadd.xlane.f32.xlu0 %v806
        %v870 = vpop.xlane.xlu0 %869
        %871 = vadd.xlane.f32.xlu0 %v808
        %v872 = vpop.xlane.xlu0 %871
        %873 = vadd.xlane.f32.xlu0 %v810
        %v874 = vpop.xlane.xlu0 %873
        %875 = vadd.xlane.f32.xlu0 %v812
        %v876 = vpop.xlane.xlu0 %875
        %877 = vadd.xlane.f32.xlu0 %v814
        %v878 = vpop.xlane.xlu0 %877
        %879 = vadd.xlane.f32.xlu0 %v816
        %v880 = vpop.xlane.xlu0 %879
        %881 = vadd.xlane.f32.xlu0 %v818
        %v882 = vpop.xlane.xlu0 %881
        %883 = vadd.xlane.f32.xlu0 %v820
        %v884 = vpop.xlane.xlu0 %883
        %v885 = vadd.f32 %v837, %v854
        %v886 = vadd.f32 %v838, %v856
        %v887 = vadd.f32 %v839, %v858
        %v888 = vadd.f32 %v840, %v860
        %v889 = vadd.f32 %v841, %v862
        %v890 = vadd.f32 %v842, %v864
        %v891 = vadd.f32 %v843, %v866
        %v892 = vadd.f32 %v844, %v868
        %v893 = vadd.f32 %v845, %v870
        %v894 = vadd.f32 %v846, %v872
        %v895 = vadd.f32 %v847, %v874
        %v896 = vadd.f32 %v848, %v876
        %v897 = vadd.f32 %v849, %v878
        %v898 = vadd.f32 %v850, %v880
        %v899 = vadd.f32 %v851, %v882
        %v900 = vadd.f32 %v852, %v884
        %vm901 = vcmask 7168
        %902 = vst.msk [vmem:[#allocation3] sm:$0xff] %vm901, %v885
        %903 = vst.msk [vmem:[#allocation3 + $0x8] sm:$0xff] %vm901, %v886
        %904 = vst.msk [vmem:[#allocation3 + $0x10] sm:$0xff] %vm901, %v887
        %905 = vst.msk [vmem:[#allocation3 + $0x18] sm:$0xff] %vm901, %v888
        %906 = vst.msk [vmem:[#allocation3 + $0x20] sm:$0xff] %vm901, %v889
        %907 = vst.msk [vmem:[#allocation3 + $0x28] sm:$0xff] %vm901, %v890
        %908 = vst.msk [vmem:[#allocation3 + $0x30] sm:$0xff] %vm901, %v891
        %909 = vst.msk [vmem:[#allocation3 + $0x38] sm:$0xff] %vm901, %v892
        %910 = vst.msk [vmem:[#allocation3 + $0x40] sm:$0xff] %vm901, %v893
        %911 = vst.msk [vmem:[#allocation3 + $0x48] sm:$0xff] %vm901, %v894
        %912 = vst.msk [vmem:[#allocation3 + $0x50] sm:$0xff] %vm901, %v895
        %913 = vst.msk [vmem:[#allocation3 + $0x58] sm:$0xff] %vm901, %v896
        %914 = vst.msk [vmem:[#allocation3 + $0x60] sm:$0xff] %vm901, %v897
        %915 = vst.msk [vmem:[#allocation3 + $0x68] sm:$0xff] %vm901, %v898
        %916 = vst.msk [vmem:[#allocation3 + $0x70] sm:$0xff] %vm901, %v899
        %917 = vst.msk [vmem:[#allocation3 + $0x78] sm:$0xff] %vm901, %v900
        %918 = vst.msk [vmem:[#allocation2] sm:$0xff] %vm901, %v629
        %919 = vst.msk [vmem:[#allocation2 + $0x8] sm:$0xff] %vm901, %v630
        %920 = vst.msk [vmem:[#allocation2 + $0x10] sm:$0xff] %vm901, %v631
        %921 = vst.msk [vmem:[#allocation2 + $0x18] sm:$0xff] %vm901, %v632
        %922 = vst.msk [vmem:[#allocation2 + $0x20] sm:$0xff] %vm901, %v633
        %923 = vst.msk [vmem:[#allocation2 + $0x28] sm:$0xff] %vm901, %v634
        %924 = vst.msk [vmem:[#allocation2 + $0x30] sm:$0xff] %vm901, %v635
        %925 = vst.msk [vmem:[#allocation2 + $0x38] sm:$0xff] %vm901, %v636
        %926 = vst.msk [vmem:[#allocation2 + $0x40] sm:$0xff] %vm901, %v637
        %927 = vst.msk [vmem:[#allocation2 + $0x48] sm:$0xff] %vm901, %v638
        %928 = vst.msk [vmem:[#allocation2 + $0x50] sm:$0xff] %vm901, %v639
        %929 = vst.msk [vmem:[#allocation2 + $0x58] sm:$0xff] %vm901, %v640
        %930 = vst.msk [vmem:[#allocation2 + $0x60] sm:$0xff] %vm901, %v641
        %931 = vst.msk [vmem:[#allocation2 + $0x68] sm:$0xff] %vm901, %v642
        %932 = vst.msk [vmem:[#allocation2 + $0x70] sm:$0xff] %vm901, %v643
        %933 = vst.msk [vmem:[#allocation2 + $0x78] sm:$0xff] %vm901, %v644
        %v934 = vld [vmem:[#allocation4] sm:$0xff]
        %v935 = vld [vmem:[#allocation4 + $0x8] sm:$0xff]
        %v936 = vld [vmem:[#allocation4 + $0x10] sm:$0xff]
        %v937 = vld [vmem:[#allocation4 + $0x18] sm:$0xff]
        %v938 = vld [vmem:[#allocation4 + $0x20] sm:$0xff]
        %v939 = vld [vmem:[#allocation4 + $0x28] sm:$0xff]
        %v940 = vld [vmem:[#allocation4 + $0x30] sm:$0xff]
        %v941 = vld [vmem:[#allocation4 + $0x38] sm:$0xff]
        %v942 = vld [vmem:[#allocation4 + $0x40] sm:$0xff]
        %v943 = vld [vmem:[#allocation4 + $0x48] sm:$0xff]
        %v944 = vld [vmem:[#allocation4 + $0x50] sm:$0xff]
        %v945 = vld [vmem:[#allocation4 + $0x58] sm:$0xff]
        %v946 = vld [vmem:[#allocation4 + $0x60] sm:$0xff]
        %v947 = vld [vmem:[#allocation4 + $0x68] sm:$0xff]
        %v948 = vld [vmem:[#allocation4 + $0x70] sm:$0xff]
        %v949 = vld [vmem:[#allocation4 + $0x78] sm:$0xff]
        %951 = vset.pattern.permute.xlu0 0
        %952 = vperm.xlu0 %951, %v662
        %v953 = vpop.permute.xlu0 %952
        %956 = vset.pattern.permute.xlu0 0
        %957 = vperm.xlu0 %956, %v664
        %v958 = vpop.permute.xlu0 %957
        %961 = vset.pattern.permute.xlu0 0
        %962 = vperm.xlu0 %961, %v666
        %v963 = vpop.permute.xlu0 %962
        %966 = vset.pattern.permute.xlu0 0
        %967 = vperm.xlu0 %966, %v668
        %v968 = vpop.permute.xlu0 %967
        %971 = vset.pattern.permute.xlu0 0
        %972 = vperm.xlu0 %971, %v670
        %v973 = vpop.permute.xlu0 %972
        %976 = vset.pattern.permute.xlu0 0
        %977 = vperm.xlu0 %976, %v672
        %v978 = vpop.permute.xlu0 %977
        %981 = vset.pattern.permute.xlu0 0
        %982 = vperm.xlu0 %981, %v674
        %v983 = vpop.permute.xlu0 %982
        %986 = vset.pattern.permute.xlu0 0
        %987 = vperm.xlu0 %986, %v676
        %v988 = vpop.permute.xlu0 %987
        %991 = vset.pattern.permute.xlu0 0
        %992 = vperm.xlu0 %991, %v678
        %v993 = vpop.permute.xlu0 %992
        %996 = vset.pattern.permute.xlu0 0
        %997 = vperm.xlu0 %996, %v680
        %v998 = vpop.permute.xlu0 %997
        %1001 = vset.pattern.permute.xlu0 0
        %1002 = vperm.xlu0 %1001, %v682
        %v1003 = vpop.permute.xlu0 %1002
        %1006 = vset.pattern.permute.xlu0 0
        %1007 = vperm.xlu0 %1006, %v684
        %v1008 = vpop.permute.xlu0 %1007
        %1011 = vset.pattern.permute.xlu0 0
        %1012 = vperm.xlu0 %1011, %v686
        %v1013 = vpop.permute.xlu0 %1012
        %1016 = vset.pattern.permute.xlu0 0
        %1017 = vperm.xlu0 %1016, %v688
        %v1018 = vpop.permute.xlu0 %1017
        %1021 = vset.pattern.permute.xlu0 0
        %1022 = vperm.xlu0 %1021, %v690
        %v1023 = vpop.permute.xlu0 %1022
        %1026 = vset.pattern.permute.xlu0 0
        %1027 = vperm.xlu0 %1026, %v692
        %v1028 = vpop.permute.xlu0 %1027
        %v1030 = vmul.f32 %v953, %v934
        %v1031 = vmul.f32 %v958, %v935
        %v1032 = vmul.f32 %v963, %v936
        %v1033 = vmul.f32 %v968, %v937
        %v1034 = vmul.f32 %v973, %v938
        %v1035 = vmul.f32 %v978, %v939
        %v1036 = vmul.f32 %v983, %v940
        %v1037 = vmul.f32 %v988, %v941
        %v1038 = vmul.f32 %v993, %v942
        %v1039 = vmul.f32 %v998, %v943
        %v1040 = vmul.f32 %v1003, %v944
        %v1041 = vmul.f32 %v1008, %v945
        %v1042 = vmul.f32 %v1013, %v946
        %v1043 = vmul.f32 %v1018, %v947
        %v1044 = vmul.f32 %v1023, %v948
        %v1045 = vmul.f32 %v1028, %v949
        %v1046 = vpack.c.bf16 %v792, %v790
        %v1047 = vpack.c.bf16 %v796, %v794
        %v1048 = vpack.c.bf16 %v800, %v798
        %v1049 = vpack.c.bf16 %v804, %v802
        %v1050 = vpack.c.bf16 %v808, %v806
        %v1051 = vpack.c.bf16 %v812, %v810
        %v1052 = vpack.c.bf16 %v816, %v814
        %v1053 = vpack.c.bf16 %v820, %v818
        %v1054 = vld [vmem:[%s337] sm:$0xff]
        %v1055 = vld [vmem:[%s337 + $0x8] sm:$0xff]
        %v1056 = vld [vmem:[%s337 + $0x10] sm:$0xff]
        %v1057 = vld [vmem:[%s337 + $0x18] sm:$0xff]
        %v1058 = vld [vmem:[%s337 + $0x20] sm:$0xff]
        %v1059 = vld [vmem:[%s337 + $0x28] sm:$0xff]
        %v1060 = vld [vmem:[%s337 + $0x30] sm:$0xff]
        %v1061 = vld [vmem:[%s337 + $0x38] sm:$0xff]
        %v1062 = vld [vmem:[%s337 + $0x40] sm:$0xff]
        %v1063 = vld [vmem:[%s337 + $0x48] sm:$0xff]
        %v1064 = vld [vmem:[%s337 + $0x50] sm:$0xff]
        %v1065 = vld [vmem:[%s337 + $0x58] sm:$0xff]
        %v1066 = vld [vmem:[%s337 + $0x60] sm:$0xff]
        %v1067 = vld [vmem:[%s337 + $0x68] sm:$0xff]
        %v1068 = vld [vmem:[%s337 + $0x70] sm:$0xff]
        %v1069 = vld [vmem:[%s337 + $0x78] sm:$0xff]
        %v1070 = vpack.c.bf16 %v1055, %v1054
        %v1071 = vpack.c.bf16 %v1057, %v1056
        %v1072 = vpack.c.bf16 %v1059, %v1058
        %v1073 = vpack.c.bf16 %v1061, %v1060
        %v1074 = vpack.c.bf16 %v1063, %v1062
        %v1075 = vpack.c.bf16 %v1065, %v1064
        %v1076 = vpack.c.bf16 %v1067, %v1066
        %v1077 = vpack.c.bf16 %v1069, %v1068
        %1078 = vmatpush.bf16.msra.mxu0 %v1077
        %1079 = vmatpush.bf16.msra.mxu0 %v1076
        %1080 = vmatpush.bf16.msra.mxu0 %v1075
        %1081 = vmatpush.bf16.msra.mxu0 %v1074
        %1082 = vmatpush.bf16.msra.mxu0 %v1073
        %1083 = vmatpush.bf16.msra.mxu0 %v1072
        %1084 = vmatpush.bf16.msra.mxu0 %v1071
        %1085 = vmatpush.bf16.msra.mxu0 %v1070
        %1086 = vmatmul.bf16.gmra.mxu0 %v1046
        %v1087 = vpop.f32.mrf.mxu0
        %v1088 = vadd.f32 0.0, %v1087
        %v1089 = vpop.f32.mrf.mxu0
        %v1090 = vadd.f32 0.0, %v1089
        %1091 = vmatmul.bf16.gmra.mxu0 %v1047
        %v1092 = vpop.f32.mrf.mxu0
        %v1093 = vadd.f32 0.0, %v1092
        %v1094 = vpop.f32.mrf.mxu0
        %v1095 = vadd.f32 0.0, %v1094
        %1096 = vmatmul.bf16.gmra.mxu0 %v1048
        %v1097 = vpop.f32.mrf.mxu0
        %v1098 = vadd.f32 0.0, %v1097
        %v1099 = vpop.f32.mrf.mxu0
        %v1100 = vadd.f32 0.0, %v1099
        %1101 = vmatmul.bf16.gmra.mxu0 %v1049
        %v1102 = vpop.f32.mrf.mxu0
        %v1103 = vadd.f32 0.0, %v1102
        %v1104 = vpop.f32.mrf.mxu0
        %v1105 = vadd.f32 0.0, %v1104
        %1106 = vmatmul.bf16.gmra.mxu0 %v1050
        %v1107 = vpop.f32.mrf.mxu0
        %v1108 = vadd.f32 0.0, %v1107
        %v1109 = vpop.f32.mrf.mxu0
        %v1110 = vadd.f32 0.0, %v1109
        %1111 = vmatmul.bf16.gmra.mxu0 %v1051
        %v1112 = vpop.f32.mrf.mxu0
        %v1113 = vadd.f32 0.0, %v1112
        %v1114 = vpop.f32.mrf.mxu0
        %v1115 = vadd.f32 0.0, %v1114
        %1116 = vmatmul.bf16.gmra.mxu0 %v1052
        %v1117 = vpop.f32.mrf.mxu0
        %v1118 = vadd.f32 0.0, %v1117
        %v1119 = vpop.f32.mrf.mxu0
        %v1120 = vadd.f32 0.0, %v1119
        %1121 = vmatmul.bf16.gmra.mxu0 %v1053
        %v1122 = vpop.f32.mrf.mxu0
        %v1123 = vadd.f32 0.0, %v1122
        %v1124 = vpop.f32.mrf.mxu0
        %v1125 = vadd.f32 0.0, %v1124
        %1126 = vdwg.mxu0
        %v1127 = vadd.f32 %v1030, %v1088
        %v1128 = vadd.f32 %v1031, %v1090
        %v1129 = vadd.f32 %v1032, %v1093
        %v1130 = vadd.f32 %v1033, %v1095
        %v1131 = vadd.f32 %v1034, %v1098
        %v1132 = vadd.f32 %v1035, %v1100
        %v1133 = vadd.f32 %v1036, %v1103
        %v1134 = vadd.f32 %v1037, %v1105
        %v1135 = vadd.f32 %v1038, %v1108
        %v1136 = vadd.f32 %v1039, %v1110
        %v1137 = vadd.f32 %v1040, %v1113
        %v1138 = vadd.f32 %v1041, %v1115
        %v1139 = vadd.f32 %v1042, %v1118
        %v1140 = vadd.f32 %v1043, %v1120
        %v1141 = vadd.f32 %v1044, %v1123
        %v1142 = vadd.f32 %v1045, %v1125
        %1143 = vst [vmem:[#allocation4] sm:$0xff] %v1127
        %1144 = vst [vmem:[#allocation4 + $0x8] sm:$0xff] %v1128
        %1145 = vst [vmem:[#allocation4 + $0x10] sm:$0xff] %v1129
        %1146 = vst [vmem:[#allocation4 + $0x18] sm:$0xff] %v1130
        %1147 = vst [vmem:[#allocation4 + $0x20] sm:$0xff] %v1131
        %1148 = vst [vmem:[#allocation4 + $0x28] sm:$0xff] %v1132
        %1149 = vst [vmem:[#allocation4 + $0x30] sm:$0xff] %v1133
        %1150 = vst [vmem:[#allocation4 + $0x38] sm:$0xff] %v1134
        %1151 = vst [vmem:[#allocation4 + $0x40] sm:$0xff] %v1135
        %1152 = vst [vmem:[#allocation4 + $0x48] sm:$0xff] %v1136
        %1153 = vst [vmem:[#allocation4 + $0x50] sm:$0xff] %v1137
        %1154 = vst [vmem:[#allocation4 + $0x58] sm:$0xff] %v1138
        %1155 = vst [vmem:[#allocation4 + $0x60] sm:$0xff] %v1139
        %1156 = vst [vmem:[#allocation4 + $0x68] sm:$0xff] %v1140
        %1157 = vst [vmem:[#allocation4 + $0x70] sm:$0xff] %v1141
        %1158 = vst [vmem:[#allocation4 + $0x78] sm:$0xff] %v1142
        %p1159 = scmp.eq.s32.totalorder %s34, 1
        // Predicated region
        $region57: #{tpu_custom_call.1} parent=35 // pred_check
          %p1160 = pneg %p1159
        $region58: #{tpu_custom_call.1} parent=35 // pred_check_branch
          %1162 = sbr.rel (%p1160) target = $region60
        $region59: #{tpu_custom_call.1} parent=35 // pred_region
          %v1163 = vld [vmem:[#allocation3] sm:$0xff]
          %v1164 = vld [vmem:[#allocation3 + $0x8] sm:$0xff]
          %v1165 = vld [vmem:[#allocation3 + $0x10] sm:$0xff]
          %v1166 = vld [vmem:[#allocation3 + $0x18] sm:$0xff]
          %v1167 = vld [vmem:[#allocation3 + $0x20] sm:$0xff]
          %v1168 = vld [vmem:[#allocation3 + $0x28] sm:$0xff]
          %v1169 = vld [vmem:[#allocation3 + $0x30] sm:$0xff]
          %v1170 = vld [vmem:[#allocation3 + $0x38] sm:$0xff]
          %v1171 = vld [vmem:[#allocation3 + $0x40] sm:$0xff]
          %v1172 = vld [vmem:[#allocation3 + $0x48] sm:$0xff]
          %v1173 = vld [vmem:[#allocation3 + $0x50] sm:$0xff]
          %v1174 = vld [vmem:[#allocation3 + $0x58] sm:$0xff]
          %v1175 = vld [vmem:[#allocation3 + $0x60] sm:$0xff]
          %v1176 = vld [vmem:[#allocation3 + $0x68] sm:$0xff]
          %v1177 = vld [vmem:[#allocation3 + $0x70] sm:$0xff]
          %v1178 = vld [vmem:[#allocation3 + $0x78] sm:$0xff]
          %v1179 = vrcp.pop %v1163
          %v1180 = vrcp.pop %v1164
          %v1181 = vrcp.pop %v1165
          %v1182 = vrcp.pop %v1166
          %v1183 = vrcp.pop %v1167
          %v1184 = vrcp.pop %v1168
          %v1185 = vrcp.pop %v1169
          %v1186 = vrcp.pop %v1170
          %v1187 = vrcp.pop %v1171
          %v1188 = vrcp.pop %v1172
          %v1189 = vrcp.pop %v1173
          %v1190 = vrcp.pop %v1174
          %v1191 = vrcp.pop %v1175
          %v1192 = vrcp.pop %v1176
          %v1193 = vrcp.pop %v1177
          %v1194 = vrcp.pop %v1178
          %v1195 = vld [vmem:[#allocation4] sm:$0xff]
          %v1196 = vld [vmem:[#allocation4 + $0x8] sm:$0xff]
          %v1197 = vld [vmem:[#allocation4 + $0x10] sm:$0xff]
          %v1198 = vld [vmem:[#allocation4 + $0x18] sm:$0xff]
          %v1199 = vld [vmem:[#allocation4 + $0x20] sm:$0xff]
          %v1200 = vld [vmem:[#allocation4 + $0x28] sm:$0xff]
          %v1201 = vld [vmem:[#allocation4 + $0x30] sm:$0xff]
          %v1202 = vld [vmem:[#allocation4 + $0x38] sm:$0xff]
          %v1203 = vld [vmem:[#allocation4 + $0x40] sm:$0xff]
          %v1204 = vld [vmem:[#allocation4 + $0x48] sm:$0xff]
          %v1205 = vld [vmem:[#allocation4 + $0x50] sm:$0xff]
          %v1206 = vld [vmem:[#allocation4 + $0x58] sm:$0xff]
          %v1207 = vld [vmem:[#allocation4 + $0x60] sm:$0xff]
          %v1208 = vld [vmem:[#allocation4 + $0x68] sm:$0xff]
          %v1209 = vld [vmem:[#allocation4 + $0x70] sm:$0xff]
          %v1210 = vld [vmem:[#allocation4 + $0x78] sm:$0xff]
          %1212 = vset.pattern.permute.xlu0 0
          %1213 = vperm.xlu0 %1212, %v1179
          %v1214 = vpop.permute.xlu0 %1213
          %1217 = vset.pattern.permute.xlu0 0
          %1218 = vperm.xlu0 %1217, %v1180
          %v1219 = vpop.permute.xlu0 %1218
          %1222 = vset.pattern.permute.xlu0 0
          %1223 = vperm.xlu0 %1222, %v1181
          %v1224 = vpop.permute.xlu0 %1223
          %1227 = vset.pattern.permute.xlu0 0
          %1228 = vperm.xlu0 %1227, %v1182
          %v1229 = vpop.permute.xlu0 %1228
          %1232 = vset.pattern.permute.xlu0 0
          %1233 = vperm.xlu0 %1232, %v1183
          %v1234 = vpop.permute.xlu0 %1233
          %1237 = vset.pattern.permute.xlu0 0
          %1238 = vperm.xlu0 %1237, %v1184
          %v1239 = vpop.permute.xlu0 %1238
          %1242 = vset.pattern.permute.xlu0 0
          %1243 = vperm.xlu0 %1242, %v1185
          %v1244 = vpop.permute.xlu0 %1243
          %1247 = vset.pattern.permute.xlu0 0
          %1248 = vperm.xlu0 %1247, %v1186
          %v1249 = vpop.permute.xlu0 %1248
          %1252 = vset.pattern.permute.xlu0 0
          %1253 = vperm.xlu0 %1252, %v1187
          %v1254 = vpop.permute.xlu0 %1253
          %1257 = vset.pattern.permute.xlu0 0
          %1258 = vperm.xlu0 %1257, %v1188
          %v1259 = vpop.permute.xlu0 %1258
          %1262 = vset.pattern.permute.xlu0 0
          %1263 = vperm.xlu0 %1262, %v1189
          %v1264 = vpop.permute.xlu0 %1263
          %1267 = vset.pattern.permute.xlu0 0
          %1268 = vperm.xlu0 %1267, %v1190
          %v1269 = vpop.permute.xlu0 %1268
          %1272 = vset.pattern.permute.xlu0 0
          %1273 = vperm.xlu0 %1272, %v1191
          %v1274 = vpop.permute.xlu0 %1273
          %1277 = vset.pattern.permute.xlu0 0
          %1278 = vperm.xlu0 %1277, %v1192
          %v1279 = vpop.permute.xlu0 %1278
          %1282 = vset.pattern.permute.xlu0 0
          %1283 = vperm.xlu0 %1282, %v1193
          %v1284 = vpop.permute.xlu0 %1283
          %1287 = vset.pattern.permute.xlu0 0
          %1288 = vperm.xlu0 %1287, %v1194
          %v1289 = vpop.permute.xlu0 %1288
          %v1291 = vmul.f32 %v1195, %v1214
          %v1292 = vmul.f32 %v1196, %v1219
          %v1293 = vmul.f32 %v1197, %v1224
          %v1294 = vmul.f32 %v1198, %v1229
          %v1295 = vmul.f32 %v1199, %v1234
          %v1296 = vmul.f32 %v1200, %v1239
          %v1297 = vmul.f32 %v1201, %v1244
          %v1298 = vmul.f32 %v1202, %v1249
          %v1299 = vmul.f32 %v1203, %v1254
          %v1300 = vmul.f32 %v1204, %v1259
          %v1301 = vmul.f32 %v1205, %v1264
          %v1302 = vmul.f32 %v1206, %v1269
          %v1303 = vmul.f32 %v1207, %v1274
          %v1304 = vmul.f32 %v1208, %v1279
          %v1305 = vmul.f32 %v1209, %v1284
          %v1306 = vmul.f32 %v1210, %v1289
          %1307 = vst [vmem:[%s377] sm:$0xff] %v1291
          %1308 = vst [vmem:[%s377 + $0x8] sm:$0xff] %v1292
          %1309 = vst [vmem:[%s377 + $0x10] sm:$0xff] %v1293
          %1310 = vst [vmem:[%s377 + $0x18] sm:$0xff] %v1294
          %1311 = vst [vmem:[%s377 + $0x20] sm:$0xff] %v1295
          %1312 = vst [vmem:[%s377 + $0x28] sm:$0xff] %v1296
          %1313 = vst [vmem:[%s377 + $0x30] sm:$0xff] %v1297
          %1314 = vst [vmem:[%s377 + $0x38] sm:$0xff] %v1298
          %1315 = vst [vmem:[%s377 + $0x40] sm:$0xff] %v1299
          %1316 = vst [vmem:[%s377 + $0x48] sm:$0xff] %v1300
          %1317 = vst [vmem:[%s377 + $0x50] sm:$0xff] %v1301
          %1318 = vst [vmem:[%s377 + $0x58] sm:$0xff] %v1302
          %1319 = vst [vmem:[%s377 + $0x60] sm:$0xff] %v1303
          %1320 = vst [vmem:[%s377 + $0x68] sm:$0xff] %v1304
          %1321 = vst [vmem:[%s377 + $0x70] sm:$0xff] %v1305
          %1322 = vst [vmem:[%s377 + $0x78] sm:$0xff] %v1306
        $region60: #{tpu_custom_call.1} parent=35 // pred_fallthru
          _
        %s1323 = sand.u32 %s168, 1
        %s1324 = scalar_lea.sflag [#allocation7], %s1323
        %s1325 = sand.u32 %s168, 1
        %s1326 = smul.addr %s1325, 128
        %s1327 = scalar_lea.vmem [#allocation13], %s1326
        // Predicated region
        $region61: #{tpu_custom_call.1} parent=35 // pred_check
          %p1328 = pneg %p178
        $region62: #{tpu_custom_call.1} parent=35 // pred_check_branch
          %1330 = sbr.rel (%p1328) target = $region64
        $region63: #{tpu_custom_call.1} parent=35 // pred_region
          %s1331 = smul.u32 16, %s33
          %1333 = vsyncadd %s1324, 0
          %s1334 = smul.addr %s32, 32
          %s1335 = sadd.s32 %s1331, %s1334
          %s1336 = smul.addr %s1335, 8
          %s1337 = scalar_lea.hbm %s4, %s1336
          %s1338 = sshll.u32 %s1327, 4
          %s1339 = int_to_ptr.vmem [resolvable:$true] %s1338
          %s1340 = sshll.u32 %s1337, 4
          %s1341 = int_to_ptr.hbm [resolvable:$true] %s1340
          %1346 = dma.vmem_to_hbm [thread:$0]  %s1339, 2048, %s1341, %s1324, 128, 128, 8
        $region64: #{tpu_custom_call.1} parent=35 // pred_fallthru
          _
      $region36: #{tpu_custom_call.1} parent=5 // pred_fallthru
        _
      %p1347 = scmp.le.s32.totalorder 2, %s22
      // Predicated region
      $region65: #{tpu_custom_call.1} parent=5 // pred_check
        %p1348 = pneg %p1347
      $region66: #{tpu_custom_call.1} parent=5 // pred_check_branch
        %1350 = sbr.rel (%p1348) target = $region68
      $region67: #{tpu_custom_call.1} parent=5 // pred_region
        %s1351 = ssub.s32 %s22, 2
        // Predicated region
        $region69: #{tpu_custom_call.1} parent=67 // pred_check
          %p1352 = pneg %p184
        $region70: #{tpu_custom_call.1} parent=67 // pred_check_branch
          %1354 = sbr.rel (%p1352) target = $region72
        $region71: #{tpu_custom_call.1} parent=67 // pred_region
          %s1355 = sand.u32 %s169, 1
          %s1356 = scalar_lea.sflag [#allocation7], %s1355
          %s1357 = sand.u32 %s169, 1
          %s1358 = smul.addr %s1357, 128
          %s1359 = scalar_lea.vmem [#allocation13], %s1358
          %1361 = dma.done %s1356, 2048
        $region72: #{tpu_custom_call.1} parent=67 // pred_fallthru
          _
      $region68: #{tpu_custom_call.1} parent=5 // pred_fallthru
        _
    $region6: #{tpu_custom_call.1} parent=1 // loop_footer
      %s26 = sadd.s32 1, %s22
    $region7: #{tpu_custom_call.1} parent=1 // loop_footer_branch
      %21 = sbr.rel target = $region3
    $region8: #{tpu_custom_call.1} parent=1 // loop_exit
      _
    %1362 = vsyncpa [#allocation6], 1
    %s1363 = scalar_lea.sflag [#allocation6], 1
    %1364 = vsyncpa %s1363, 1
    %1365 = vsyncpa [#allocation9], 1
    %s1366 = scalar_lea.sflag [#allocation9], 1
    %1367 = vsyncpa %s1366, 1
    %1368 = vsyncpa [#allocation12], 1
    %s1369 = scalar_lea.sflag [#allocation12], 1
    %1370 = vsyncpa %s1369, 1
    %1371 = vsyncpa [#allocation7], 1
    %s1372 = scalar_lea.sflag [#allocation7], 1
    %1373 = vsyncpa %s1372, 1

</llo_original>
